<compile_context>
chip_gen: v5e
topology: v5e:2x2
jax: 0.10.0
libtpu: 0.0.40
codegen_flags: <defaults>
</compile_context>

<pallas_src>
import jax
import jax.numpy as jnp
import numpy as np
from jax.experimental import pallas as pl
from jax.experimental.pallas import tpu as pltpu

LEAKY_SLOPE = 0.01   # torch.nn.LeakyReLU() default
KS = 3               # kernel_size
PAD = (KS - 1) // 2  # 'same' padding for odd kernel


def _vmem_capacity_bytes():
    try:
        info = pltpu.get_tpu_info()
        return int(getattr(info, "vmem_capacity_bytes", 64 * 1024 * 1024))
    except Exception:
        return 64 * 1024 * 1024


def _pick_tile(extent, target):
    """Largest even divisor of `extent` that is <= target."""
    best = 2
    for t in range(2, min(extent, target) + 1, 2):
        if extent % t == 0:
            best = t
    return best


def _make_kernel(Cin, TW, n_wblk, Kdim, Nc, slope):
    TWoC = Nc // 2  # TWo * Cout

    def kernel(xa_ref, xb_ref, band_ref, bias_ref, o_ref, pool_sc):
        # xa_ref  : (1, TD, Hp, Wp*Cin) bf16   main D slab (padded rows [d*TD, d*TD+TD))
        # xb_ref  : (1, 2,  Hp, Wp*Cin) bf16   D halo      (padded rows [d*TD+TD, +2))
        # band_ref: (9, Kdim, Nc) bf16         banded conv weights, one per (kd, kh)
        # bias_ref: (1, Nc) f32                bias tiled over (parity, wo, co) columns
        # o_ref   : (1, TDo, Ho, Wo*Cout)      lane-dense pooled output
        # pool_sc : VMEM (TDo, H, TWoC) f32    H-pool staging (lane-dense)
        TD = xa_ref.shape[1]
        Hp = xa_ref.shape[2]
        H = Hp - 2 * PAD
        TDo, Ho = TD // 2, H // 2

        xa = xa_ref[0]                       # (TD, Hp, Wp*Cin)
        xb = xb_ref[0]                       # (2,  Hp, Wp*Cin)
        bands = band_ref[...]                # (9, Kdim, Nc)
        bias_row = bias_ref[...]             # (1, Nc)

        # Per-kd D-halo-extended slabs (leading-dim concat only; the full (TD+2)-row
        # slab is never materialized).
        x_kd = [xa] + [jnp.concatenate([xa[kd:], xb[:kd]], axis=0) for kd in (1, 2)]

        out_pieces = []
        for wblk in range(n_wblk):                       # static in-kernel W windows
            lane0 = wblk * TW * Cin
            acc = jnp.zeros((TD * H, Nc), jnp.float32)
            for kd in range(KS):
                xw = x_kd[kd][:, :, lane0:lane0 + Kdim]  # (TD, Hp, Kdim) lane window
                for kh in range(KS):
                    lhs = xw[:, kh:kh + H, :].reshape(TD * H, Kdim)
                    acc = acc + jnp.dot(lhs, bands[kd * KS + kh],
                                        preferred_element_type=jnp.float32)

            # bias + LeakyReLU in f32
            acc = acc + bias_row
            acc = jnp.maximum(acc, slope * acc)

            # W pool: columns are ordered (parity, wo, co) -> contiguous half-split max.
            aw = jnp.maximum(acc[:, :TWoC], acc[:, TWoC:])        # (TD*H, TWoC)
            # D pool: pair of H-row blocks (leading-dim halves).
            ad = aw.reshape(TDo, 2, H, TWoC)
            ad = jnp.maximum(ad[:, 0], ad[:, 1])                  # (TDo, H, TWoC)
            # H pool: stride-2 sublane reads from a small lane-dense scratch.
            pool_sc[...] = ad
            out_pieces.append(jnp.maximum(
                pool_sc[:, pl.ds(0, Ho, stride=2), :],
                pool_sc[:, pl.ds(1, Ho, stride=2), :]))           # (TDo, Ho, TWoC)

        res = out_pieces[0] if n_wblk == 1 else jnp.concatenate(out_pieces, axis=-1)
        o_ref[...] = res[None].astype(o_ref.dtype)

    return kernel


@jax.jit
def cosmoflow_conv_block(x_ncdhw, weight_oidhw, bias):
    """x_ncdhw: (N, Cin, D, H, W); weight_oidhw: (Cout, Cin, 3, 3, 3); bias: (Cout,)."""
    N, Cin, D, H, W = x_ncdhw.shape
    Cout = weight_oidhw.shape[0]
    assert weight_oidhw.shape[2:] == (KS, KS, KS) and PAD == 1
    # TODO(synk): odd spatial sizes (MaxPool3d floor semantics) not supported; assume even.
    assert D % 2 == 0 and H % 2 == 0 and W % 2 == 0

    # Generation-parameterized tiling / VMEM limit.
    cap = _vmem_capacity_bytes()
    vmem_limit = int(min(int(cap * 0.75), 100 * 1024 * 1024))
    TD = _pick_tile(D, 16 if cap >= 96 * 1024 * 1024 else 8)   # D tile (grid axis)
    TW = _pick_tile(W, 32)                                      # W window (in-kernel loop)
    assert TD % 2 == 0 and TW % 2 == 0 and D % TD == 0 and W % TW == 0
    nD, n_wblk = D // TD, W // TW

    # ---- glue: NCDHW -> NDHWC, bf16, 'same' zero padding, (W, Cin) lane fusion ----
    x = jnp.transpose(x_ncdhw, (0, 2, 3, 4, 1)).astype(jnp.bfloat16)
    x = jnp.pad(x, ((0, 0), (PAD, PAD), (PAD, PAD), (PAD, PAD), (0, 0)))
    Dp, Hp, Wp = D + 2 * PAD, H + 2 * PAD, W + 2 * PAD
    x = x.reshape(N, Dp, Hp, Wp * Cin)

    # ---- fold conv weights into 9 banded matmul RHS matrices (one per (kd, kh)) ----
    # band[kd,kh][(wi, ci), (p, wo, co)] = weight[co, ci, kd, kh, wi - (2*wo + p)]
    # when 0 <= wi - (2*wo + p) < 3, else 0.  Output columns ordered (parity, wo, co)
    # so the W max-pool in-kernel is a contiguous lane half-split.
    Kdim = (TW + 2 * PAD) * Cin
    Nc = TW * Cout
    TWo = TW // 2
    wgt = jnp.transpose(weight_oidhw, (2, 3, 4, 1, 0))          # (kd, kh, kw, Cin, Cout)
    band = jnp.zeros((KS, KS, TW + 2 * PAD, Cin, TW, Cout), jnp.float32)
    w_out = jnp.arange(TW)
    for kw in range(KS):
        val = jnp.broadcast_to(wgt[:, :, kw, :, :][None], (TW, KS, KS, Cin, Cout))
        band = band.at[:, :, w_out + kw, :, w_out, :].set(val)
    band = band.reshape(KS, KS, TW + 2 * PAD, Cin, TWo, 2, Cout)
    band = jnp.transpose(band, (0, 1, 2, 3, 5, 4, 6))           # -> (..., parity, wo, co)
    band = band.reshape(KS * KS, Kdim, Nc).astype(jnp.bfloat16)
    bias_cols = jnp.tile(bias.astype(jnp.float32), TW).reshape(1, Nc)

    Do, Ho, Wo = D // 2, H // 2, W // 2
    TDo = TD // 2
    kernel = _make_kernel(Cin, TW, n_wblk, Kdim, Nc, LEAKY_SLOPE)

    out = pl.pallas_call(
        kernel,
        out_shape=jax.ShapeDtypeStruct((N, Do, Ho, Wo * Cout), x_ncdhw.dtype),
        grid_spec=pltpu.PrefetchScalarGridSpec(
            num_scalar_prefetch=0,
            grid=(N, nD),
            in_specs=[
                # main TD-row slab of the padded input (lane-fused (W, Cin))
                pl.BlockSpec((1, TD, Hp, Wp * Cin), lambda n, d: (n, d, 0, 0)),
                # 2-row D halo (first padded rows after the tile)
                pl.BlockSpec((1, 2 * PAD, Hp, Wp * Cin),
                             lambda n, d: (n, (d + 1) * (TD // (2 * PAD)), 0, 0)),
                # banded weights / bias: constant index_map -> resident in VMEM
                pl.BlockSpec((KS * KS, Kdim, Nc), lambda n, d: (0, 0, 0)),
                pl.BlockSpec((1, Nc), lambda n, d: (0, 0)),
            ],
            out_specs=pl.BlockSpec((1, TDo, Ho, Wo * Cout), lambda n, d: (n, d, 0, 0)),
            scratch_shapes=[pltpu.VMEM((TDo, H, TWo * Cout), jnp.float32)],
        ),
        compiler_params=pltpu.CompilerParams(
            dimension_semantics=("parallel", "parallel"),   # v7x: shard across both TCs
            vmem_limit_bytes=vmem_limit,
        ),
    )(x, x, band, bias_cols)

    # Glue: back to PyTorch NCDHW layout.
    out = out.reshape(N, Do, Ho, Wo, Cout)
    return jnp.transpose(out, (0, 4, 1, 2, 3))


def reference(x, w, b):
    """Pure-JAX reference matching the PyTorch forward (NCDHW)."""
    out = jax.lax.conv_general_dilated(
        x, w, window_strides=(1, 1, 1), padding=[(PAD, PAD)] * 3,
        dimension_numbers=("NCDHW", "OIDHW", "NCDHW"),
        precision=jax.lax.Precision.HIGHEST)
    out = out + b.reshape(1, -1, 1, 1, 1)
    out = jnp.where(out >= 0, out, LEAKY_SLOPE * out)
    out = jax.lax.reduce_window(out, -jnp.inf, jax.lax.max,
                                (1, 1, 2, 2, 2), (1, 1, 2, 2, 2), "VALID")
    return out


if __name__ == "__main__":
    key = jax.random.PRNGKey(0)
    k1, k2, k3 = jax.random.split(key, 3)

    N, Cin, Cout, S = 2, 4, 8, 16   # batch=2, in_ch=4, out_ch=8, spatial=16^3
    x = jax.random.normal(k1, (N, Cin, S, S, S), dtype=jnp.float32)
    weight = jax.random.normal(k2, (Cout, Cin, KS, KS, KS), dtype=jnp.float32) * 0.1
    bias = jax.random.normal(k3, (Cout,), dtype=jnp.float32) * 0.1

    out = cosmoflow_conv_block(x, weight, bias)
    out = jax.block_until_ready(out)

    ref = reference(x, weight, bias)
    # bf16 inputs/weights with f32 accumulation (deliberate precision drop vs f32 PyTorch).
    np.testing.assert_allclose(np.asarray(out), np.asarray(ref), atol=5e-2, rtol=5e-2)
    print("KERNEL_OK")
</pallas_src>

<mosaic_0001>
module attributes {stable_mosaic.version = 11 : i64} {
  func.func @kernel(%arg0: i32, %arg1: i32, %arg2: memref<1x8x18x72xbf16, #tpu.memory_space<vmem>>, %arg3: memref<1x2x18x72xbf16, #tpu.memory_space<vmem>>, %arg4: memref<9x72x128xbf16, #tpu.memory_space<vmem>>, %arg5: memref<1x128xf32, #tpu.memory_space<vmem>>, %arg6: memref<1x4x8x64xf32, #tpu.memory_space<vmem>>, %arg7: memref<4x16x64xf32, #tpu.memory_space<vmem>>) attributes {dimension_semantics = [#tpu.dimension_semantics<parallel>, #tpu.dimension_semantics<parallel>], iteration_bounds = array<i64: 2, 2>, scalar_prefetch = 0 : i64, scratch_operands = 1 : i64, tpu.core_type = #tpu.core_type<tc>, window_params = [{transform_indices = @transform_0, window_bounds = array<i64: 1, 8, 18, 72>}, {transform_indices = @transform_1, window_bounds = array<i64: 1, 2, 18, 72>}, {pipeline_mode = #tpu.pipeline_mode<synchronous>, transform_indices = @transform_2, window_bounds = array<i64: 9, 72, 128>}, {pipeline_mode = #tpu.pipeline_mode<synchronous>, transform_indices = @transform_3, window_bounds = array<i64: 1, 128>}, {transform_indices = @transform_4, window_bounds = array<i64: 1, 4, 8, 64>}]} {
    %c0 = arith.constant 0 : index
    %c0_0 = arith.constant 0 : index
    %c0_1 = arith.constant 0 : index
    %c0_2 = arith.constant 0 : index
    %0 = vector.load %arg2[%c0, %c0_0, %c0_1, %c0_2] : memref<1x8x18x72xbf16, #tpu.memory_space<vmem>>, vector<1x8x18x72xbf16>
    %1 = vector.shape_cast %0 : vector<1x8x18x72xbf16> to vector<8x18x72xbf16>
    %c0_3 = arith.constant 0 : index
    %c0_4 = arith.constant 0 : index
    %c0_5 = arith.constant 0 : index
    %c0_6 = arith.constant 0 : index
    %2 = vector.load %arg3[%c0_3, %c0_4, %c0_5, %c0_6] : memref<1x2x18x72xbf16, #tpu.memory_space<vmem>>, vector<1x2x18x72xbf16>
    %3 = vector.shape_cast %2 : vector<1x2x18x72xbf16> to vector<2x18x72xbf16>
    %c0_7 = arith.constant 0 : index
    %c0_8 = arith.constant 0 : index
    %c0_9 = arith.constant 0 : index
    %4 = vector.load %arg4[%c0_7, %c0_8, %c0_9] : memref<9x72x128xbf16, #tpu.memory_space<vmem>>, vector<9x72x128xbf16>
    %c0_10 = arith.constant 0 : index
    %c0_11 = arith.constant 0 : index
    %5 = vector.load %arg5[%c0_10, %c0_11] : memref<1x128xf32, #tpu.memory_space<vmem>>, vector<1x128xf32>
    %6 = vector.extract_strided_slice %1 {offsets = [1, 0, 0], sizes = [7, 18, 72], strides = [1, 1, 1]} : vector<8x18x72xbf16> to vector<7x18x72xbf16>
    %7 = vector.extract_strided_slice %3 {offsets = [0, 0, 0], sizes = [1, 18, 72], strides = [1, 1, 1]} : vector<2x18x72xbf16> to vector<1x18x72xbf16>
    %8 = tpu.concatenate %6, %7 in 0 : vector<7x18x72xbf16>, vector<1x18x72xbf16> -> vector<8x18x72xbf16>
    %9 = vector.extract_strided_slice %1 {offsets = [2, 0, 0], sizes = [6, 18, 72], strides = [1, 1, 1]} : vector<8x18x72xbf16> to vector<6x18x72xbf16>
    %10 = tpu.concatenate %9, %3 in 0 : vector<6x18x72xbf16>, vector<2x18x72xbf16> -> vector<8x18x72xbf16>
    %cst = arith.constant 0.000000e+00 : f32
    %11 = vector.broadcast %cst : f32 to vector<128x128xf32>
    %12 = vector.extract_strided_slice %1 {offsets = [0, 0, 0], sizes = [8, 16, 72], strides = [1, 1, 1]} : vector<8x18x72xbf16> to vector<8x16x72xbf16>
    %13 = vector.shape_cast %12 : vector<8x16x72xbf16> to vector<128x72xbf16>
    %14 = vector.extract_strided_slice %4 {offsets = [0, 0, 0], sizes = [1, 72, 128], strides = [1, 1, 1]} : vector<9x72x128xbf16> to vector<1x72x128xbf16>
    %15 = vector.shape_cast %14 : vector<1x72x128xbf16> to vector<72x128xbf16>
    %cst_12 = arith.constant dense<0.000000e+00> : vector<128x128xf32>
    %16 = tpu.matmul %13, %15, %cst_12 {dimension_numbers = #tpu.dot_dimension_numbers<[1], [0], [0], [1], [0, 0, 1, 1], [], []>} : vector<128x72xbf16>, vector<72x128xbf16>, vector<128x128xf32> -> vector<128x128xf32>
    %17 = arith.addf %11, %16 : vector<128x128xf32>
    %18 = vector.extract_strided_slice %1 {offsets = [0, 1, 0], sizes = [8, 16, 72], strides = [1, 1, 1]} : vector<8x18x72xbf16> to vector<8x16x72xbf16>
    %19 = vector.shape_cast %18 : vector<8x16x72xbf16> to vector<128x72xbf16>
    %20 = vector.extract_strided_slice %4 {offsets = [1, 0, 0], sizes = [1, 72, 128], strides = [1, 1, 1]} : vector<9x72x128xbf16> to vector<1x72x128xbf16>
    %21 = vector.shape_cast %20 : vector<1x72x128xbf16> to vector<72x128xbf16>
    %cst_13 = arith.constant dense<0.000000e+00> : vector<128x128xf32>
    %22 = tpu.matmul %19, %21, %cst_13 {dimension_numbers = #tpu.dot_dimension_numbers<[1], [0], [0], [1], [0, 0, 1, 1], [], []>} : vector<128x72xbf16>, vector<72x128xbf16>, vector<128x128xf32> -> vector<128x128xf32>
    %23 = arith.addf %17, %22 : vector<128x128xf32>
    %24 = vector.extract_strided_slice %1 {offsets = [0, 2, 0], sizes = [8, 16, 72], strides = [1, 1, 1]} : vector<8x18x72xbf16> to vector<8x16x72xbf16>
    %25 = vector.shape_cast %24 : vector<8x16x72xbf16> to vector<128x72xbf16>
    %26 = vector.extract_strided_slice %4 {offsets = [2, 0, 0], sizes = [1, 72, 128], strides = [1, 1, 1]} : vector<9x72x128xbf16> to vector<1x72x128xbf16>
    %27 = vector.shape_cast %26 : vector<1x72x128xbf16> to vector<72x128xbf16>
    %cst_14 = arith.constant dense<0.000000e+00> : vector<128x128xf32>
    %28 = tpu.matmul %25, %27, %cst_14 {dimension_numbers = #tpu.dot_dimension_numbers<[1], [0], [0], [1], [0, 0, 1, 1], [], []>} : vector<128x72xbf16>, vector<72x128xbf16>, vector<128x128xf32> -> vector<128x128xf32>
    %29 = arith.addf %23, %28 : vector<128x128xf32>
    %30 = vector.extract_strided_slice %8 {offsets = [0, 0, 0], sizes = [8, 16, 72], strides = [1, 1, 1]} : vector<8x18x72xbf16> to vector<8x16x72xbf16>
    %31 = vector.shape_cast %30 : vector<8x16x72xbf16> to vector<128x72xbf16>
    %32 = vector.extract_strided_slice %4 {offsets = [3, 0, 0], sizes = [1, 72, 128], strides = [1, 1, 1]} : vector<9x72x128xbf16> to vector<1x72x128xbf16>
    %33 = vector.shape_cast %32 : vector<1x72x128xbf16> to vector<72x128xbf16>
    %cst_15 = arith.constant dense<0.000000e+00> : vector<128x128xf32>
    %34 = tpu.matmul %31, %33, %cst_15 {dimension_numbers = #tpu.dot_dimension_numbers<[1], [0], [0], [1], [0, 0, 1, 1], [], []>} : vector<128x72xbf16>, vector<72x128xbf16>, vector<128x128xf32> -> vector<128x128xf32>
    %35 = arith.addf %29, %34 : vector<128x128xf32>
    %36 = vector.extract_strided_slice %8 {offsets = [0, 1, 0], sizes = [8, 16, 72], strides = [1, 1, 1]} : vector<8x18x72xbf16> to vector<8x16x72xbf16>
    %37 = vector.shape_cast %36 : vector<8x16x72xbf16> to vector<128x72xbf16>
    %38 = vector.extract_strided_slice %4 {offsets = [4, 0, 0], sizes = [1, 72, 128], strides = [1, 1, 1]} : vector<9x72x128xbf16> to vector<1x72x128xbf16>
    %39 = vector.shape_cast %38 : vector<1x72x128xbf16> to vector<72x128xbf16>
    %cst_16 = arith.constant dense<0.000000e+00> : vector<128x128xf32>
    %40 = tpu.matmul %37, %39, %cst_16 {dimension_numbers = #tpu.dot_dimension_numbers<[1], [0], [0], [1], [0, 0, 1, 1], [], []>} : vector<128x72xbf16>, vector<72x128xbf16>, vector<128x128xf32> -> vector<128x128xf32>
    %41 = arith.addf %35, %40 : vector<128x128xf32>
    %42 = vector.extract_strided_slice %8 {offsets = [0, 2, 0], sizes = [8, 16, 72], strides = [1, 1, 1]} : vector<8x18x72xbf16> to vector<8x16x72xbf16>
    %43 = vector.shape_cast %42 : vector<8x16x72xbf16> to vector<128x72xbf16>
    %44 = vector.extract_strided_slice %4 {offsets = [5, 0, 0], sizes = [1, 72, 128], strides = [1, 1, 1]} : vector<9x72x128xbf16> to vector<1x72x128xbf16>
    %45 = vector.shape_cast %44 : vector<1x72x128xbf16> to vector<72x128xbf16>
    %cst_17 = arith.constant dense<0.000000e+00> : vector<128x128xf32>
    %46 = tpu.matmul %43, %45, %cst_17 {dimension_numbers = #tpu.dot_dimension_numbers<[1], [0], [0], [1], [0, 0, 1, 1], [], []>} : vector<128x72xbf16>, vector<72x128xbf16>, vector<128x128xf32> -> vector<128x128xf32>
    %47 = arith.addf %41, %46 : vector<128x128xf32>
    %48 = vector.extract_strided_slice %10 {offsets = [0, 0, 0], sizes = [8, 16, 72], strides = [1, 1, 1]} : vector<8x18x72xbf16> to vector<8x16x72xbf16>
    %49 = vector.shape_cast %48 : vector<8x16x72xbf16> to vector<128x72xbf16>
    %50 = vector.extract_strided_slice %4 {offsets = [6, 0, 0], sizes = [1, 72, 128], strides = [1, 1, 1]} : vector<9x72x128xbf16> to vector<1x72x128xbf16>
    %51 = vector.shape_cast %50 : vector<1x72x128xbf16> to vector<72x128xbf16>
    %cst_18 = arith.constant dense<0.000000e+00> : vector<128x128xf32>
    %52 = tpu.matmul %49, %51, %cst_18 {dimension_numbers = #tpu.dot_dimension_numbers<[1], [0], [0], [1], [0, 0, 1, 1], [], []>} : vector<128x72xbf16>, vector<72x128xbf16>, vector<128x128xf32> -> vector<128x128xf32>
    %53 = arith.addf %47, %52 : vector<128x128xf32>
    %54 = vector.extract_strided_slice %10 {offsets = [0, 1, 0], sizes = [8, 16, 72], strides = [1, 1, 1]} : vector<8x18x72xbf16> to vector<8x16x72xbf16>
    %55 = vector.shape_cast %54 : vector<8x16x72xbf16> to vector<128x72xbf16>
    %56 = vector.extract_strided_slice %4 {offsets = [7, 0, 0], sizes = [1, 72, 128], strides = [1, 1, 1]} : vector<9x72x128xbf16> to vector<1x72x128xbf16>
    %57 = vector.shape_cast %56 : vector<1x72x128xbf16> to vector<72x128xbf16>
    %cst_19 = arith.constant dense<0.000000e+00> : vector<128x128xf32>
    %58 = tpu.matmul %55, %57, %cst_19 {dimension_numbers = #tpu.dot_dimension_numbers<[1], [0], [0], [1], [0, 0, 1, 1], [], []>} : vector<128x72xbf16>, vector<72x128xbf16>, vector<128x128xf32> -> vector<128x128xf32>
    %59 = arith.addf %53, %58 : vector<128x128xf32>
    %60 = vector.extract_strided_slice %10 {offsets = [0, 2, 0], sizes = [8, 16, 72], strides = [1, 1, 1]} : vector<8x18x72xbf16> to vector<8x16x72xbf16>
    %61 = vector.shape_cast %60 : vector<8x16x72xbf16> to vector<128x72xbf16>
    %62 = vector.extract_strided_slice %4 {offsets = [8, 0, 0], sizes = [1, 72, 128], strides = [1, 1, 1]} : vector<9x72x128xbf16> to vector<1x72x128xbf16>
    %63 = vector.shape_cast %62 : vector<1x72x128xbf16> to vector<72x128xbf16>
    %cst_20 = arith.constant dense<0.000000e+00> : vector<128x128xf32>
    %64 = tpu.matmul %61, %63, %cst_20 {dimension_numbers = #tpu.dot_dimension_numbers<[1], [0], [0], [1], [0, 0, 1, 1], [], []>} : vector<128x72xbf16>, vector<72x128xbf16>, vector<128x128xf32> -> vector<128x128xf32>
    %65 = arith.addf %59, %64 : vector<128x128xf32>
    %66 = vector.broadcast %5 : vector<1x128xf32> to vector<128x128xf32>
    %67 = arith.addf %65, %66 : vector<128x128xf32>
    %cst_21 = arith.constant 0.00999999977 : f32
    %68 = vector.broadcast %cst_21 : f32 to vector<128x128xf32>
    %69 = arith.mulf %68, %67 : vector<128x128xf32>
    %70 = arith.maximumf %67, %69 : vector<128x128xf32>
    %71 = vector.extract_strided_slice %70 {offsets = [0, 0], sizes = [128, 64], strides = [1, 1]} : vector<128x128xf32> to vector<128x64xf32>
    %72 = vector.extract_strided_slice %70 {offsets = [0, 64], sizes = [128, 64], strides = [1, 1]} : vector<128x128xf32> to vector<128x64xf32>
    %73 = arith.maximumf %71, %72 : vector<128x64xf32>
    %74 = vector.shape_cast %73 : vector<128x64xf32> to vector<4x2x16x64xf32>
    %75 = vector.extract_strided_slice %74 {offsets = [0, 0, 0, 0], sizes = [4, 1, 16, 64], strides = [1, 1, 1, 1]} : vector<4x2x16x64xf32> to vector<4x1x16x64xf32>
    %76 = vector.shape_cast %75 : vector<4x1x16x64xf32> to vector<4x16x64xf32>
    %77 = vector.extract_strided_slice %74 {offsets = [0, 1, 0, 0], sizes = [4, 1, 16, 64], strides = [1, 1, 1, 1]} : vector<4x2x16x64xf32> to vector<4x1x16x64xf32>
    %78 = vector.shape_cast %77 : vector<4x1x16x64xf32> to vector<4x16x64xf32>
    %79 = arith.maximumf %76, %78 : vector<4x16x64xf32>
    %c0_22 = arith.constant 0 : index
    %c0_23 = arith.constant 0 : index
    %c0_24 = arith.constant 0 : index
    %80 = vector.load %arg7[%c0_22, %c0_23, %c0_24] : memref<4x16x64xf32, #tpu.memory_space<vmem>>, vector<4x16x64xf32>
    tpu.vector_store %arg7[%c0_22, %c0_23, %c0_24], %79 {strides = array<i32>} : memref<4x16x64xf32, #tpu.memory_space<vmem>>, vector<4x16x64xf32>,
    %c0_25 = arith.constant 0 : index
    %c0_26 = arith.constant 0 : index
    %c0_27 = arith.constant 0 : index
    %81 = tpu.strided_load %arg7[%c0_25, %c0_26, %c0_27] {strides = array<i32: 1, 2, 1>} : memref<4x16x64xf32, #tpu.memory_space<vmem>>, vector<4x8x64xf32>
    %c0_28 = arith.constant 0 : index
    %c1 = arith.constant 1 : index
    %c0_29 = arith.constant 0 : index
    %82 = tpu.strided_load %arg7[%c0_28, %c1, %c0_29] {strides = array<i32: 1, 2, 1>} : memref<4x16x64xf32, #tpu.memory_space<vmem>>, vector<4x8x64xf32>
    %83 = arith.maximumf %81, %82 : vector<4x8x64xf32>
    %84 = vector.shape_cast %83 : vector<4x8x64xf32> to vector<1x4x8x64xf32>
    %c0_30 = arith.constant 0 : index
    %c0_31 = arith.constant 0 : index
    %c0_32 = arith.constant 0 : index
    %c0_33 = arith.constant 0 : index
    %85 = vector.load %arg6[%c0_30, %c0_31, %c0_32, %c0_33] : memref<1x4x8x64xf32, #tpu.memory_space<vmem>>, vector<1x4x8x64xf32>
    tpu.vector_store %arg6[%c0_30, %c0_31, %c0_32, %c0_33], %84 {strides = array<i32>} : memref<1x4x8x64xf32, #tpu.memory_space<vmem>>, vector<1x4x8x64xf32>,
    return
  }
  func.func @transform_0(%arg0: i32, %arg1: i32) -> (i32, i32, i32, i32) {
    %c0_i32 = arith.constant 0 : i32
    %c0_i32_0 = arith.constant 0 : i32
    %c0_i32_1 = arith.constant 0 : i32
    return %arg0, %arg1, %c0_i32, %c0_i32_0 : i32, i32, i32, i32
  }
  func.func @transform_1(%arg0: i32, %arg1: i32) -> (i32, i32, i32, i32) {
    %c1_i32 = arith.constant 1 : i32
    %0 = arith.addi %arg1, %c1_i32 : i32
    %c4_i32 = arith.constant 4 : i32
    %1 = arith.muli %0, %c4_i32 : i32
    %c0_i32 = arith.constant 0 : i32
    %c0_i32_0 = arith.constant 0 : i32
    %c0_i32_1 = arith.constant 0 : i32
    return %arg0, %1, %c0_i32, %c0_i32_0 : i32, i32, i32, i32
  }
  func.func @transform_2(%arg0: i32, %arg1: i32) -> (i32, i32, i32) {
    %c0_i32 = arith.constant 0 : i32
    %c0_i32_0 = arith.constant 0 : i32
    %c0_i32_1 = arith.constant 0 : i32
    %c0_i32_2 = arith.constant 0 : i32
    return %c0_i32, %c0_i32_0, %c0_i32_1 : i32, i32, i32
  }
  func.func @transform_3(%arg0: i32, %arg1: i32) -> (i32, i32) {
    %c0_i32 = arith.constant 0 : i32
    %c0_i32_0 = arith.constant 0 : i32
    %c0_i32_1 = arith.constant 0 : i32
    return %c0_i32, %c0_i32_0 : i32, i32
  }
  func.func @transform_4(%arg0: i32, %arg1: i32) -> (i32, i32, i32, i32) {
    %c0_i32 = arith.constant 0 : i32
    %c0_i32_0 = arith.constant 0 : i32
    %c0_i32_1 = arith.constant 0 : i32
    return %arg0, %arg1, %c0_i32, %c0_i32_0 : i32, i32, i32, i32
  }
}

</mosaic_0001>

<llo_original>
// kernel: tile.8
$region0: #{tile.8}
  #allocation0 [shape = 's32[1]{0}', space=sflag, size = 0x4, scoped, tag = 'scoped memory for tile.8']
  %s0 = inlined_call_operand.vmem [shape: f32[8], index: 0, kind: input, shape index: {}]
  %s1 = inlined_call_operand.vmem [shape: f32[16,8], index: 1, kind: output, shape index: {}]
  // Predicated region
  $region2: #{tile.8} parent=0 // pred_check
    _
  $region3: #{tile.8} parent=0 // pred_check_branch
    %3 = sbr.rel (0) target = $region5
  $region4: #{tile.8} parent=0 // pred_region
    _
  $region5: #{tile.8} parent=0 // pred_fallthru
    _
  %v4 = vld [vmem:[%s0] ss:$0 sm:$0xff]
  %5 = vst [vmem:[%s1] sm:$0xff] %v4
  %s6 = scalar_lea.vmem %s1, 8
  %7 = vst [vmem:[%s6] sm:$0xff] %v4

// kernel: tile.9
$region0: #{tile.9}
  %s0 = inlined_call_operand.vmem [shape: f32[16,8], index: 0, kind: input, shape index: {}]
  %s1 = inlined_call_operand.vmem [shape: f32[1,128], index: 1, kind: output, shape index: {}]
  $region1: #{tile.9} parent=0
    #allocation0 [shape = 'u8[4096]{0}', space=vmem, size = 0x1000, scoped, tag = 'scoped mem for output reshape']
    %v2 = vld [vmem:[%s0] sm:$0x1]
    %vm3 = vcmask 64512
    %4 = vst.msk [vmem:[#allocation0] sm:$0x1] %vm3, %v2
    %s5 = scalar_lea.vmem %s0, 15
    %v6 = vld [vmem:[%s5] sm:$0x1]
    %7 = vrot.lane.b32.xlu0 %v6, 120
    %v8 = vpop.permute.xlu0 %7
    %vm9 = vcmask 1048512
    %10 = vst.msk [vmem:[#allocation0] sm:$0x1] %vm9, %v8
    %s11 = scalar_lea.vmem %s0, 14
    %v12 = vld [vmem:[%s11] sm:$0x1]
    %13 = vrot.lane.b32.xlu0 %v12, 112
    %v14 = vpop.permute.xlu0 %13
    %vm15 = vcmask 982912
    %16 = vst.msk [vmem:[#allocation0] sm:$0x1] %vm15, %v14
    %s17 = scalar_lea.vmem %s0, 13
    %v18 = vld [vmem:[%s17] sm:$0x1]
    %19 = vrot.lane.b32.xlu0 %v18, 104
    %v20 = vpop.permute.xlu0 %19
    %vm21 = vcmask 917312
    %22 = vst.msk [vmem:[#allocation0] sm:$0x1] %vm21, %v20
    %s23 = scalar_lea.vmem %s0, 12
    %v24 = vld [vmem:[%s23] sm:$0x1]
    %25 = vrot.lane.b32.xlu0 %v24, 96
    %v26 = vpop.permute.xlu0 %25
    %vm27 = vcmask 851712
    %28 = vst.msk [vmem:[#allocation0] sm:$0x1] %vm27, %v26
    %s29 = scalar_lea.vmem %s0, 11
    %v30 = vld [vmem:[%s29] sm:$0x1]
    %31 = vrot.lane.b32.xlu0 %v30, 88
    %v32 = vpop.permute.xlu0 %31
    %vm33 = vcmask 786112
    %34 = vst.msk [vmem:[#allocation0] sm:$0x1] %vm33, %v32
    %s35 = scalar_lea.vmem %s0, 10
    %v36 = vld [vmem:[%s35] sm:$0x1]
    %37 = vrot.lane.b32.xlu0 %v36, 80
    %v38 = vpop.permute.xlu0 %37
    %vm39 = vcmask 720512
    %40 = vst.msk [vmem:[#allocation0] sm:$0x1] %vm39, %v38
    %s41 = scalar_lea.vmem %s0, 9
    %v42 = vld [vmem:[%s41] sm:$0x1]
    %43 = vrot.lane.b32.xlu0 %v42, 72
    %v44 = vpop.permute.xlu0 %43
    %vm45 = vcmask 654912
    %46 = vst.msk [vmem:[#allocation0] sm:$0x1] %vm45, %v44
    %s47 = scalar_lea.vmem %s0, 8
    %v48 = vld [vmem:[%s47] sm:$0x1]
    %49 = vrot.lane.b32.xlu0 %v48, 64
    %v50 = vpop.permute.xlu0 %49
    %vm51 = vcmask 589312
    %52 = vst.msk [vmem:[#allocation0] sm:$0x1] %vm51, %v50
    %s53 = scalar_lea.vmem %s0, 7
    %v54 = vld [vmem:[%s53] sm:$0x1]
    %55 = vrot.lane.b32.xlu0 %v54, 56
    %v56 = vpop.permute.xlu0 %55
    %vm57 = vcmask 523712
    %58 = vst.msk [vmem:[#allocation0] sm:$0x1] %vm57, %v56
    %s59 = scalar_lea.vmem %s0, 6
    %v60 = vld [vmem:[%s59] sm:$0x1]
    %61 = vrot.lane.b32.xlu0 %v60, 48
    %v62 = vpop.permute.xlu0 %61
    %vm63 = vcmask 458112
    %64 = vst.msk [vmem:[#allocation0] sm:$0x1] %vm63, %v62
    %s65 = scalar_lea.vmem %s0, 5
    %v66 = vld [vmem:[%s65] sm:$0x1]
    %67 = vrot.lane.b32.xlu0 %v66, 40
    %v68 = vpop.permute.xlu0 %67
    %vm69 = vcmask 392512
    %70 = vst.msk [vmem:[#allocation0] sm:$0x1] %vm69, %v68
    %s71 = scalar_lea.vmem %s0, 4
    %v72 = vld [vmem:[%s71] sm:$0x1]
    %73 = vrot.lane.b32.xlu0 %v72, 32
    %v74 = vpop.permute.xlu0 %73
    %vm75 = vcmask 326912
    %76 = vst.msk [vmem:[#allocation0] sm:$0x1] %vm75, %v74
    %s77 = scalar_lea.vmem %s0, 3
    %v78 = vld [vmem:[%s77] sm:$0x1]
    %79 = vrot.lane.b32.xlu0 %v78, 24
    %v80 = vpop.permute.xlu0 %79
    %vm81 = vcmask 261312
    %82 = vst.msk [vmem:[#allocation0] sm:$0x1] %vm81, %v80
    %s83 = scalar_lea.vmem %s0, 2
    %v84 = vld [vmem:[%s83] sm:$0x1]
    %85 = vrot.lane.b32.xlu0 %v84, 16
    %v86 = vpop.permute.xlu0 %85
    %vm87 = vcmask 195712
    %88 = vst.msk [vmem:[#allocation0] sm:$0x1] %vm87, %v86
    %s89 = scalar_lea.vmem %s0, 1
    %v90 = vld [vmem:[%s89] sm:$0x1]
    %91 = vrot.lane.b32.xlu0 %v90, 8
    %v92 = vpop.permute.xlu0 %91
    %vm93 = vcmask 130112
    %94 = vst.msk [vmem:[#allocation0] sm:$0x1] %vm93, %v92
    %s96 = ssub.s32 2, 1
    %v97 = vld [vmem:[#allocation0] sm:%s96]
    %s99 = ssub.s32 2, 1
    %100 = vst [vmem:[%s1] sm:%s99] %v97

// kernel: cosmoflow_conv_block.1
$region0: #{cosmoflow_conv_block.1}
  #allocation0 [shape = 'u32[]', space=smem, size = 0x4, offset = 0x4, fixed_abs, tag = 'smem constant byte address 0x4 - core index']
  #allocation1 [shape = 'u32[72,128]{1,0:T(1,128)}', space=vmem, size = 0x9000, scoped, tag = 'internal scratch']
  #allocation2 [shape = 'f32[4,16,64]{2,1,0:T(8,128)}', space=vmem, size = 0x8000, scoped, tag = 'scratch operand']
  %s0 = inlined_call_operand.vmem [shape: bf16[2,18,18,72], index: 0, kind: input, shape index: {}, may-alias: {0,1}]
  %s1 = inlined_call_operand.vmem [shape: bf16[2,18,18,72], index: 1, kind: input, shape index: {}, may-alias: {0,1}]
  %s2 = inlined_call_operand.vmem [shape: bf16[9,72,128], index: 2, kind: input, shape index: {}]
  %s3 = inlined_call_operand.vmem [shape: f32[1,128], index: 3, kind: input, shape index: {}]
  %s4 = inlined_call_operand.vmem [shape: f32[2,8,8,64], index: 4, kind: output, shape index: {}]
  %s5 = sld [smem:[#allocation0]]
  $region49: #{cosmoflow_conv_block.1} parent=0
    _
  %s7 = ssub.s32 1, %s5
  %s8 = scalar_select 0, %s7, %s5
  loop: start=0, step=1, limit=6
  $region2: #{cosmoflow_conv_block.1} parent=0 // loop_pre_header
    _
  $region3: #{cosmoflow_conv_block.1} parent=0 // loop_header
    %s10 = sphi 0, %s14
    %p11 = scmp.ge.s32.totalorder %s10, 6
    %s17 = sphi 0, %s29
    %s18 = sphi 0, %s25
    %s19 = sphi 0, %s17
    %s20 = sphi 0, %s18
    %s21 = sphi 0, %s19
    %s22 = sphi 0, %s20
    %s34 = sphi 0, %s36
    %s37 = sphi 0, %s34
    %s38 = sphi 0, %s37
    %s54 = sphi 0, %s38
    %s66 = sphi 0, %s68
    %s69 = sphi 0, %s66
    %s70 = sphi 0, %s69
    %s86 = sphi 0, %s70
    %s90 = sphi 0, %s90
    %s92 = sphi 0, %s90
    %s93 = sphi 0, %s92
    %s107 = sphi 0, %s93
    %s111 = sphi 0, %s111
    %s113 = sphi 0, %s111
    %s114 = sphi 0, %s113
    %s128 = sphi 0, %s114
    %s136 = sphi 0, %s138
    %s139 = sphi 0, %s136
    %s140 = sphi 0, %s139
    %s156 = sphi 0, %s140
  $region4: #{cosmoflow_conv_block.1} parent=0 // loop_header_branch
    %13 = sbr.rel (%p11) target = $region8
  $region5: #{cosmoflow_conv_block.1} parent=0 // loop_body
    %s15 = ssub.s32 %s10, 1
    %s16 = ssub.s32 %s10, 2
    %s23 = sadd.s32 1, %s18
    %p24 = scmp.ge.s32.totalorder %s23, 2
    %s25 = scalar_select %p24, 0, %s23
    %s26 = sadd.s32 1, %s17
    %s27 = scalar_select %p24, %s26, %s17
    %p28 = scmp.ge.s32.totalorder %s27, 2
    %s29 = scalar_select %p28, 0, %s27
    %s30 = ssub.s32 %s17, %s29
    %s31 = ssub.s32 %s18, %s25
    %s32 = sor.u32 %s30, %s31
    %p33 = scmp.eq.s32.totalorder %s32, 0
    %s35 = sadd.s32 %s34, 1
    %s36 = scalar_select %p33, %s34, %s35
    %p39 = pneg %p33
    %p40 = scmp.eq.s32.totalorder %s10, 3
    %p41 = por %p39, %p40
    %p42 = scmp.ne.s32.totalorder %s34, %s37
    %p43 = scmp.eq.s32.totalorder %s10, 0
    %p44 = por %p42, %p43
    %p45 = scmp.ne.s32.totalorder %s34, %s37
    %p46 = scmp.eq.s32.totalorder %s15, 3
    %p47 = por %p45, %p46
    %p48 = scmp.ne.s32.totalorder %s37, %s38
    %p49 = scmp.eq.s32.totalorder %s15, 0
    %p50 = por %p48, %p49
    %p51 = scmp.ne.s32.totalorder %s37, %s38
    %p52 = scmp.eq.s32.totalorder %s16, 3
    %p53 = por %p51, %p52
    %p55 = scmp.ne.s32.totalorder %s38, %s54
    %p56 = scmp.eq.s32.totalorder %s16, 0
    %p57 = por %p55, %p56
    %s58 = sadd.s32 %s18, 1
    %s59 = smul.u32 %s58, 4
    %s60 = sadd.s32 %s25, 1
    %s61 = smul.u32 %s60, 4
    %s62 = ssub.s32 %s17, %s29
    %s63 = ssub.s32 %s59, %s61
    %s64 = sor.u32 %s62, %s63
    %p65 = scmp.eq.s32.totalorder %s64, 0
    %s67 = sadd.s32 %s66, 1
    %s68 = scalar_select %p65, %s66, %s67
    %p71 = pneg %p65
    %p72 = scmp.eq.s32.totalorder %s10, 3
    %p73 = por %p71, %p72
    %p74 = scmp.ne.s32.totalorder %s66, %s69
    %p75 = scmp.eq.s32.totalorder %s10, 0
    %p76 = por %p74, %p75
    %p77 = scmp.ne.s32.totalorder %s66, %s69
    %p78 = scmp.eq.s32.totalorder %s15, 3
    %p79 = por %p77, %p78
    %p80 = scmp.ne.s32.totalorder %s69, %s70
    %p81 = scmp.eq.s32.totalorder %s15, 0
    %p82 = por %p80, %p81
    %p83 = scmp.ne.s32.totalorder %s69, %s70
    %p84 = scmp.eq.s32.totalorder %s16, 3
    %p85 = por %p83, %p84
    %p87 = scmp.ne.s32.totalorder %s70, %s86
    %p88 = scmp.eq.s32.totalorder %s16, 0
    %p89 = por %p87, %p88
    %s91 = sadd.s32 %s90, 1
    %p94 = scmp.eq.s32.totalorder %s10, 3
    %p95 = scmp.ne.s32.totalorder %s90, %s92
    %p96 = scmp.eq.s32.totalorder %s10, 0
    %p97 = por %p95, %p96
    %p98 = scmp.ne.s32.totalorder %s90, %s92
    %p99 = scmp.eq.s32.totalorder %s15, 3
    %p100 = por %p98, %p99
    %p101 = scmp.ne.s32.totalorder %s92, %s93
    %p102 = scmp.eq.s32.totalorder %s15, 0
    %p103 = por %p101, %p102
    %p104 = scmp.ne.s32.totalorder %s92, %s93
    %p105 = scmp.eq.s32.totalorder %s16, 3
    %p106 = por %p104, %p105
    %p108 = scmp.ne.s32.totalorder %s93, %s107
    %p109 = scmp.eq.s32.totalorder %s16, 0
    %p110 = por %p108, %p109
    %s112 = sadd.s32 %s111, 1
    %p115 = scmp.eq.s32.totalorder %s10, 3
    %p116 = scmp.ne.s32.totalorder %s111, %s113
    %p117 = scmp.eq.s32.totalorder %s10, 0
    %p118 = por %p116, %p117
    %p119 = scmp.ne.s32.totalorder %s111, %s113
    %p120 = scmp.eq.s32.totalorder %s15, 3
    %p121 = por %p119, %p120
    %p122 = scmp.ne.s32.totalorder %s113, %s114
    %p123 = scmp.eq.s32.totalorder %s15, 0
    %p124 = por %p122, %p123
    %p125 = scmp.ne.s32.totalorder %s113, %s114
    %p126 = scmp.eq.s32.totalorder %s16, 3
    %p127 = por %p125, %p126
    %p129 = scmp.ne.s32.totalorder %s114, %s128
    %p130 = scmp.eq.s32.totalorder %s16, 0
    %p131 = por %p129, %p130
    %s132 = ssub.s32 %s17, %s29
    %s133 = ssub.s32 %s18, %s25
    %s134 = sor.u32 %s132, %s133
    %p135 = scmp.eq.s32.totalorder %s134, 0
    %s137 = sadd.s32 %s136, 1
    %s138 = scalar_select %p135, %s136, %s137
    %p141 = pneg %p135
    %p142 = scmp.eq.s32.totalorder %s10, 3
    %p143 = por %p141, %p142
    %p144 = scmp.ne.s32.totalorder %s136, %s139
    %p145 = scmp.eq.s32.totalorder %s10, 0
    %p146 = por %p144, %p145
    %p147 = scmp.ne.s32.totalorder %s136, %s139
    %p148 = scmp.eq.s32.totalorder %s15, 3
    %p149 = por %p147, %p148
    %p150 = scmp.ne.s32.totalorder %s139, %s140
    %p151 = scmp.eq.s32.totalorder %s15, 0
    %p152 = por %p150, %p151
    %p153 = scmp.ne.s32.totalorder %s139, %s140
    %p154 = scmp.eq.s32.totalorder %s16, 3
    %p155 = por %p153, %p154
    %p157 = scmp.ne.s32.totalorder %s140, %s156
    %p158 = scmp.eq.s32.totalorder %s16, 0
    %p159 = por %p157, %p158
    %p160 = scmp.le.s32.totalorder 1, %s10
    %p161 = scmp.lt.s32.totalorder %s10, 5
    %p162 = pnand %p160, %p161
    %p163 = pneg %p162
    // Predicated region
    $region9: #{cosmoflow_conv_block.1} parent=5 // pred_check
      _
    $region10: #{cosmoflow_conv_block.1} parent=5 // pred_check_branch
      %165 = sbr.rel (%p162) target = $region12
    $region11: #{cosmoflow_conv_block.1} parent=5 // pred_region
      %s166 = ssub.s32 %s10, 1
      // Predicated region
      $region13: #{cosmoflow_conv_block.1} parent=11 // pred_check
        %p167 = pneg %p103
      $region14: #{cosmoflow_conv_block.1} parent=11 // pred_check_branch
        %169 = sbr.rel (%p167) target = $region16
      $region15: #{cosmoflow_conv_block.1} parent=11 // pred_region
        _
      $region16: #{cosmoflow_conv_block.1} parent=11 // pred_fallthru
        _
      // Predicated region
      $region17: #{cosmoflow_conv_block.1} parent=11 // pred_check
        %p170 = pneg %p124
      $region18: #{cosmoflow_conv_block.1} parent=11 // pred_check_branch
        %172 = sbr.rel (%p170) target = $region20
      $region19: #{cosmoflow_conv_block.1} parent=11 // pred_region
        _
      $region20: #{cosmoflow_conv_block.1} parent=11 // pred_fallthru
        _
    $region12: #{cosmoflow_conv_block.1} parent=5 // pred_fallthru
      _
    %p173 = scmp.lt.s32.totalorder %s10, 4
    // Predicated region
    $region21: #{cosmoflow_conv_block.1} parent=5 // pred_check
      %p174 = pneg %p173
    $region22: #{cosmoflow_conv_block.1} parent=5 // pred_check_branch
      %176 = sbr.rel (%p174) target = $region24
    $region23: #{cosmoflow_conv_block.1} parent=5 // pred_region
      // Predicated region
      $region25: #{cosmoflow_conv_block.1} parent=23 // pred_check
        %p177 = pneg %p44
      $region26: #{cosmoflow_conv_block.1} parent=23 // pred_check_branch
        %179 = sbr.rel (%p177) target = $region28
      $region27: #{cosmoflow_conv_block.1} parent=23 // pred_region
        %s180 = smul.u32 8, %s18
        %s181 = ssub.s32 18, %s180
        %p182 = scmp.lt.s32.totalorder %s181, 8
        %s183 = scalar_select %p182, %s181, 8
        %s184 = smul.u32 4, %s183
        %s185 = smul.u32 %s184, 3
        %p186 = scmp.lt.s32.totalorder %s17, 1
        %s187 = scalar_select %p186, %s17, 1
        %p188 = scmp.lt.s32.totalorder %s180, 17
        %s189 = scalar_select %p188, %s180, 17
        %s190 = smul.addr %s189, 3
        %s191 = smul.addr %s187, 54
        %s192 = sadd.s32 %s190, %s191
        %s193 = smul.addr %s192, 4
        %s194 = scalar_lea.vmem %s0, %s193
        %s195 = smul.u32 8, %s18
        %s196 = ssub.s32 18, %s195
        %p197 = scmp.lt.s32.totalorder %s196, 8
        %s198 = scalar_select %p197, %s196, 8
        %s199 = smul.u32 4, %s198
        %s200 = smul.u32 %s199, 3
      $region28: #{cosmoflow_conv_block.1} parent=23 // pred_fallthru
        _
      // Predicated region
      $region29: #{cosmoflow_conv_block.1} parent=23 // pred_check
        %p201 = pneg %p76
      $region30: #{cosmoflow_conv_block.1} parent=23 // pred_check_branch
        %203 = sbr.rel (%p201) target = $region32
      $region31: #{cosmoflow_conv_block.1} parent=23 // pred_region
        %s204 = sadd.s32 %s18, 1
        %s205 = smul.u32 %s204, 4
        %s206 = smul.u32 2, %s205
        %p207 = scmp.lt.s32.totalorder %s17, 1
        %s208 = scalar_select %p207, %s17, 1
        %p209 = scmp.lt.s32.totalorder %s206, 17
        %s210 = scalar_select %p209, %s206, 17
        %s211 = smul.addr %s210, 3
        %s212 = smul.addr %s208, 54
        %s213 = sadd.s32 %s211, %s212
        %s214 = smul.addr %s213, 4
        %s215 = scalar_lea.vmem %s1, %s214
        %s216 = sadd.s32 %s18, 1
        %s217 = smul.u32 %s216, 4
        %s218 = smul.u32 2, %s217
      $region32: #{cosmoflow_conv_block.1} parent=23 // pred_fallthru
        _
    $region24: #{cosmoflow_conv_block.1} parent=5 // pred_fallthru
      _
    %p219 = scmp.le.s32.totalorder 1, %s10
    %p220 = scmp.lt.s32.totalorder %s10, 5
    %p221 = pnand %p219, %p220
    %p222 = pneg %p221
    // Predicated region
    $region33: #{cosmoflow_conv_block.1} parent=5 // pred_check
      _
    $region34: #{cosmoflow_conv_block.1} parent=5 // pred_check_branch
      %224 = sbr.rel (%p221) target = $region36
    $region35: #{cosmoflow_conv_block.1} parent=5 // pred_region
      %s225 = ssub.s32 %s10, 1
      %s226 = smul.u32 8, %s20
      %s227 = ssub.s32 18, %s226
      %p228 = scmp.lt.s32.totalorder %s227, 8
      %s229 = scalar_select %p228, %s227, 8
      %s230 = smul.u32 4, %s229
      %s231 = smul.u32 %s230, 3
      %p232 = scmp.lt.s32.totalorder %s19, 1
      %s233 = scalar_select %p232, %s19, 1
      %p234 = scmp.lt.s32.totalorder %s226, 17
      %s235 = scalar_select %p234, %s226, 17
      %s236 = smul.addr %s235, 3
      %s237 = smul.addr %s233, 54
      %s238 = sadd.s32 %s236, %s237
      %s239 = smul.addr %s238, 4
      %s240 = scalar_lea.vmem %s0, %s239
      %p241 = pneg %p50
      %p242 = pneg %p47
      %s243 = sadd.s32 %s20, 1
      %s244 = smul.u32 %s243, 4
      %s245 = smul.u32 2, %s244
      %p246 = scmp.lt.s32.totalorder %s19, 1
      %s247 = scalar_select %p246, %s19, 1
      %p248 = scmp.lt.s32.totalorder %s245, 17
      %s249 = scalar_select %p248, %s245, 17
      %s250 = smul.addr %s249, 3
      %s251 = smul.addr %s247, 54
      %s252 = sadd.s32 %s250, %s251
      %s253 = smul.addr %s252, 4
      %s254 = scalar_lea.vmem %s1, %s253
      %p255 = pneg %p82
      %p256 = pneg %p79
      %p257 = pneg %p103
      %p258 = pneg %p100
      %p259 = pneg %p124
      %p260 = pneg %p121
      %p261 = pneg %p152
      %p262 = pneg %p149
      %s263 = smul.u32 4, %s20
      %p264 = scmp.lt.s32.totalorder %s19, 1
      %s265 = scalar_select %p264, %s19, 1
      %p266 = scmp.lt.s32.totalorder %s263, 7
      %s267 = scalar_select %p266, %s263, 7
      %s268 = smul.addr %s265, 8
      %s269 = sadd.s32 %s267, %s268
      %s270 = smul.addr %s269, 8
      %s271 = scalar_lea.vmem %s4, %s270
      %s272 = smul.u32 8, %s20
      %s273 = ssub.s32 18, %s272
      %p274 = scmp.lt.s32.totalorder %s273, 8
      %s275 = scalar_select %p274, %s273, 8
      %s276 = smul.u32 4, %s275
      %s277 = smul.u32 %s276, 3
      %p278 = scmp.lt.s32.totalorder %s19, 1
      %s279 = scalar_select %p278, %s19, 1
      %p280 = scmp.lt.s32.totalorder %s272, 17
      %s281 = scalar_select %p280, %s272, 17
      %s282 = smul.addr %s281, 3
      %s283 = smul.addr %s279, 54
      %s284 = sadd.s32 %s282, %s283
      %s285 = smul.addr %s284, 4
      %s286 = scalar_lea.vmem %s0, %s285
      %s287 = smul.u32 8, %s20
      %s288 = ssub.s32 18, %s287
      %p289 = scmp.lt.s32.totalorder %s288, 8
      %s290 = scalar_select %p289, %s288, 8
      %s291 = smul.u32 4, %s290
      %s292 = smul.u32 %s291, 3
      %s293 = sadd.s32 %s20, 1
      %s294 = smul.u32 %s293, 4
      %s295 = smul.u32 2, %s294
      %p296 = scmp.lt.s32.totalorder %s19, 1
      %s297 = scalar_select %p296, %s19, 1
      %p298 = scmp.lt.s32.totalorder %s295, 17
      %s299 = scalar_select %p298, %s295, 17
      %s300 = smul.addr %s299, 3
      %s301 = smul.addr %s297, 54
      %s302 = sadd.s32 %s300, %s301
      %s303 = smul.addr %s302, 4
      %s304 = scalar_lea.vmem %s1, %s303
      %s305 = sadd.s32 %s20, 1
      %s306 = smul.u32 %s305, 4
      %s307 = smul.u32 2, %s306
      %s308 = smul.u32 4, %s20
      %p309 = scmp.lt.s32.totalorder %s19, 1
      %s310 = scalar_select %p309, %s19, 1
      %p311 = scmp.lt.s32.totalorder %s308, 7
      %s312 = scalar_select %p311, %s308, 7
      %s313 = smul.addr %s310, 8
      %s314 = sadd.s32 %s312, %s313
      %s315 = smul.addr %s314, 8
      %s316 = scalar_lea.vmem %s4, %s315
      %s317 = smul.u32 4, %s20
      %v319 = vld [vmem:[%s286] sm:$0xf]
      %v320 = vld [vmem:[%s286 + $0x4] sm:$0xf]
      %v321 = vld [vmem:[%s286 + $0x8] sm:$0x1]
      %v322 = vld [vmem:[%s286 + $0xc] sm:$0xf]
      %v323 = vld [vmem:[%s286 + $0x10] sm:$0xf]
      %v324 = vld [vmem:[%s286 + $0x14] sm:$0x1]
      %v325 = vld [vmem:[%s286 + $0x18] sm:$0xf]
      %v326 = vld [vmem:[%s286 + $0x1c] sm:$0xf]
      %v327 = vld [vmem:[%s286 + $0x20] sm:$0x1]
      %v328 = vld [vmem:[%s286 + $0x24] sm:$0xf]
      %v329 = vld [vmem:[%s286 + $0x28] sm:$0xf]
      %v330 = vld [vmem:[%s286 + $0x2c] sm:$0x1]
      %v331 = vld [vmem:[%s286 + $0x30] sm:$0xf]
      %v332 = vld [vmem:[%s286 + $0x34] sm:$0xf]
      %v333 = vld [vmem:[%s286 + $0x38] sm:$0x1]
      %v334 = vld [vmem:[%s286 + $0x3c] sm:$0xf]
      %v335 = vld [vmem:[%s286 + $0x40] sm:$0xf]
      %v336 = vld [vmem:[%s286 + $0x44] sm:$0x1]
      %v337 = vld [vmem:[%s286 + $0x48] sm:$0xf]
      %v338 = vld [vmem:[%s286 + $0x4c] sm:$0xf]
      %v339 = vld [vmem:[%s286 + $0x50] sm:$0x1]
      %v340 = vld [vmem:[%s286 + $0x54] sm:$0xf]
      %v341 = vld [vmem:[%s286 + $0x58] sm:$0xf]
      %v342 = vld [vmem:[%s286 + $0x5c] sm:$0x1]
      %v343 = vld [vmem:[%s304] sm:$0xf]
      %v344 = vld [vmem:[%s304 + $0x4] sm:$0xf]
      %v345 = vld [vmem:[%s304 + $0x8] sm:$0x1]
      %v346 = vld [vmem:[%s304 + $0xc] sm:$0xf]
      %v347 = vld [vmem:[%s304 + $0x10] sm:$0xf]
      %v348 = vld [vmem:[%s304 + $0x14] sm:$0x1]
      %v349 = vld [vmem:[%s2] sm:$0xf]
      %v350 = vld [vmem:[%s2 + $0x4] sm:$0xf]
      %v351 = vld [vmem:[%s2 + $0x8] sm:$0xf]
      %v352 = vld [vmem:[%s2 + $0xc] sm:$0xf]
      %v353 = vld [vmem:[%s2 + $0x10] sm:$0xf]
      %v354 = vld [vmem:[%s2 + $0x14] sm:$0xf]
      %v355 = vld [vmem:[%s2 + $0x18] sm:$0xf]
      %v356 = vld [vmem:[%s2 + $0x1c] sm:$0xf]
      %v357 = vld [vmem:[%s2 + $0x20] sm:$0xf]
      %v358 = vld [vmem:[%s2 + $0x24] sm:$0xf]
      %v359 = vld [vmem:[%s2 + $0x28] sm:$0xf]
      %v360 = vld [vmem:[%s2 + $0x2c] sm:$0xf]
      %v361 = vld [vmem:[%s2 + $0x30] sm:$0xf]
      %v362 = vld [vmem:[%s2 + $0x34] sm:$0xf]
      %v363 = vld [vmem:[%s2 + $0x38] sm:$0xf]
      %v364 = vld [vmem:[%s2 + $0x3c] sm:$0xf]
      %v365 = vld [vmem:[%s2 + $0x40] sm:$0xf]
      %v366 = vld [vmem:[%s2 + $0x44] sm:$0xf]
      %v367 = vld [vmem:[%s2 + $0x48] sm:$0xf]
      %v368 = vld [vmem:[%s2 + $0x4c] sm:$0xf]
      %v369 = vld [vmem:[%s2 + $0x50] sm:$0xf]
      %v370 = vld [vmem:[%s2 + $0x54] sm:$0xf]
      %v371 = vld [vmem:[%s2 + $0x58] sm:$0xf]
      %v372 = vld [vmem:[%s2 + $0x5c] sm:$0xf]
      %v373 = vld [vmem:[%s2 + $0x60] sm:$0xf]
      %v374 = vld [vmem:[%s2 + $0x64] sm:$0xf]
      %v375 = vld [vmem:[%s2 + $0x68] sm:$0xf]
      %v376 = vld [vmem:[%s2 + $0x6c] sm:$0xf]
      %v377 = vld [vmem:[%s2 + $0x70] sm:$0xf]
      %v378 = vld [vmem:[%s2 + $0x74] sm:$0xf]
      %v379 = vld [vmem:[%s2 + $0x78] sm:$0xf]
      %v380 = vld [vmem:[%s2 + $0x7c] sm:$0xf]
      %v381 = vld [vmem:[%s2 + $0x80] sm:$0xf]
      %v382 = vld [vmem:[%s2 + $0x84] sm:$0xf]
      %v383 = vld [vmem:[%s2 + $0x88] sm:$0xf]
      %v384 = vld [vmem:[%s2 + $0x8c] sm:$0xf]
      %v385 = vld [vmem:[%s2 + $0x90] sm:$0xf]
      %v386 = vld [vmem:[%s2 + $0x94] sm:$0xf]
      %v387 = vld [vmem:[%s2 + $0x98] sm:$0xf]
      %v388 = vld [vmem:[%s2 + $0x9c] sm:$0xf]
      %v389 = vld [vmem:[%s2 + $0xa0] sm:$0xf]
      %v390 = vld [vmem:[%s2 + $0xa4] sm:$0xf]
      %v391 = vld [vmem:[%s2 + $0xa8] sm:$0xf]
      %v392 = vld [vmem:[%s2 + $0xac] sm:$0xf]
      %v393 = vld [vmem:[%s2 + $0xb0] sm:$0xf]
      %v394 = vld [vmem:[%s2 + $0xb4] sm:$0xf]
      %v395 = vld [vmem:[%s2 + $0xb8] sm:$0xf]
      %v396 = vld [vmem:[%s2 + $0xbc] sm:$0xf]
      %v397 = vld [vmem:[%s2 + $0xc0] sm:$0xf]
      %v398 = vld [vmem:[%s2 + $0xc4] sm:$0xf]
      %v399 = vld [vmem:[%s2 + $0xc8] sm:$0xf]
      %v400 = vld [vmem:[%s2 + $0xcc] sm:$0xf]
      %v401 = vld [vmem:[%s2 + $0xd0] sm:$0xf]
      %v402 = vld [vmem:[%s2 + $0xd4] sm:$0xf]
      %v403 = vld [vmem:[%s2 + $0xd8] sm:$0xf]
      %v404 = vld [vmem:[%s2 + $0xdc] sm:$0xf]
      %v405 = vld [vmem:[%s2 + $0xe0] sm:$0xf]
      %v406 = vld [vmem:[%s2 + $0xe4] sm:$0xf]
      %v407 = vld [vmem:[%s2 + $0xe8] sm:$0xf]
      %v408 = vld [vmem:[%s2 + $0xec] sm:$0xf]
      %v409 = vld [vmem:[%s2 + $0xf0] sm:$0xf]
      %v410 = vld [vmem:[%s2 + $0xf4] sm:$0xf]
      %v411 = vld [vmem:[%s2 + $0xf8] sm:$0xf]
      %v412 = vld [vmem:[%s2 + $0xfc] sm:$0xf]
      %v413 = vld [vmem:[%s2 + $0x100] sm:$0xf]
      %v414 = vld [vmem:[%s2 + $0x104] sm:$0xf]
      %v415 = vld [vmem:[%s2 + $0x108] sm:$0xf]
      %v416 = vld [vmem:[%s2 + $0x10c] sm:$0xf]
      %v417 = vld [vmem:[%s2 + $0x110] sm:$0xf]
      %v418 = vld [vmem:[%s2 + $0x114] sm:$0xf]
      %v419 = vld [vmem:[%s2 + $0x118] sm:$0xf]
      %v420 = vld [vmem:[%s2 + $0x11c] sm:$0xf]
      %v421 = vld [vmem:[%s2 + $0x120] sm:$0xf]
      %v422 = vld [vmem:[%s2 + $0x124] sm:$0xf]
      %v423 = vld [vmem:[%s2 + $0x128] sm:$0xf]
      %v424 = vld [vmem:[%s2 + $0x12c] sm:$0xf]
      %v425 = vld [vmem:[%s2 + $0x130] sm:$0xf]
      %v426 = vld [vmem:[%s2 + $0x134] sm:$0xf]
      %v427 = vld [vmem:[%s2 + $0x138] sm:$0xf]
      %v428 = vld [vmem:[%s2 + $0x13c] sm:$0xf]
      %v429 = vld [vmem:[%s2 + $0x140] sm:$0xf]
      %v430 = vld [vmem:[%s3] sm:$0x1]
      %vm431 = vsmask.f32 3328
      %vm432 = vsmask.f32 7440
      %vm433 = vmor %vm431, %vm432
      %v435 = vshrl.u32 %v319, 16
      %v437 = vrot.slane %v435, 4
      %v438 = vshll.u32 %v319, 16
      %v440 = vrot.slane %v438, 5
      %v441 = vor.u32 %v437, %v440
      %v442 = vrot.slane %v441, 4
      %v444 = vshll.u32 %v320, 16
      %v446 = vrot.slane %v444, 5
      %v447 = vsel %vm433, %v442, %v446
      %v448 = vshrl.u32 %v320, 16
      %v450 = vrot.slane %v448, 4
      %v451 = vor.u32 %v450, %v446
      %v452 = vrot.slane %v451, 4
      %v454 = vshll.u32 %v321, 16
      %v456 = vrot.slane %v454, 5
      %v457 = vsel %vm433, %v452, %v456
      %v459 = vshrl.u32 %v322, 16
      %v461 = vrot.slane %v459, 4
      %v462 = vshll.u32 %v322, 16
      %v464 = vrot.slane %v462, 5
      %v465 = vor.u32 %v461, %v464
      %v466 = vrot.slane %v465, 4
      %v468 = vshll.u32 %v323, 16
      %v470 = vrot.slane %v468, 5
      %v471 = vsel %vm433, %v466, %v470
      %v472 = vshrl.u32 %v323, 16
      %v474 = vrot.slane %v472, 4
      %v475 = vor.u32 %v474, %v470
      %v476 = vrot.slane %v475, 4
      %v478 = vshll.u32 %v324, 16
      %v480 = vrot.slane %v478, 5
      %v481 = vsel %vm433, %v476, %v480
      %v483 = vshrl.u32 %v325, 16
      %v485 = vrot.slane %v483, 4
      %v486 = vshll.u32 %v325, 16
      %v488 = vrot.slane %v486, 5
      %v489 = vor.u32 %v485, %v488
      %v490 = vrot.slane %v489, 4
      %v492 = vshll.u32 %v326, 16
      %v494 = vrot.slane %v492, 5
      %v495 = vsel %vm433, %v490, %v494
      %v496 = vshrl.u32 %v326, 16
      %v498 = vrot.slane %v496, 4
      %v499 = vor.u32 %v498, %v494
      %v500 = vrot.slane %v499, 4
      %v502 = vshll.u32 %v327, 16
      %v504 = vrot.slane %v502, 5
      %v505 = vsel %vm433, %v500, %v504
      %v507 = vshrl.u32 %v328, 16
      %v509 = vrot.slane %v507, 4
      %v510 = vshll.u32 %v328, 16
      %v512 = vrot.slane %v510, 5
      %v513 = vor.u32 %v509, %v512
      %v514 = vrot.slane %v513, 4
      %v516 = vshll.u32 %v329, 16
      %v518 = vrot.slane %v516, 5
      %v519 = vsel %vm433, %v514, %v518
      %v520 = vshrl.u32 %v329, 16
      %v522 = vrot.slane %v520, 4
      %v523 = vor.u32 %v522, %v518
      %v524 = vrot.slane %v523, 4
      %v526 = vshll.u32 %v330, 16
      %v528 = vrot.slane %v526, 5
      %v529 = vsel %vm433, %v524, %v528
      %v531 = vshrl.u32 %v331, 16
      %v533 = vrot.slane %v531, 4
      %v534 = vshll.u32 %v331, 16
      %v536 = vrot.slane %v534, 5
      %v537 = vor.u32 %v533, %v536
      %v538 = vrot.slane %v537, 4
      %v540 = vshll.u32 %v332, 16
      %v542 = vrot.slane %v540, 5
      %v543 = vsel %vm433, %v538, %v542
      %v544 = vshrl.u32 %v332, 16
      %v546 = vrot.slane %v544, 4
      %v547 = vor.u32 %v546, %v542
      %v548 = vrot.slane %v547, 4
      %v550 = vshll.u32 %v333, 16
      %v552 = vrot.slane %v550, 5
      %v553 = vsel %vm433, %v548, %v552
      %v555 = vshrl.u32 %v334, 16
      %v557 = vrot.slane %v555, 4
      %v558 = vshll.u32 %v334, 16
      %v560 = vrot.slane %v558, 5
      %v561 = vor.u32 %v557, %v560
      %v562 = vrot.slane %v561, 4
      %v564 = vshll.u32 %v335, 16
      %v566 = vrot.slane %v564, 5
      %v567 = vsel %vm433, %v562, %v566
      %v568 = vshrl.u32 %v335, 16
      %v570 = vrot.slane %v568, 4
      %v571 = vor.u32 %v570, %v566
      %v572 = vrot.slane %v571, 4
      %v574 = vshll.u32 %v336, 16
      %v576 = vrot.slane %v574, 5
      %v577 = vsel %vm433, %v572, %v576
      %v579 = vshrl.u32 %v337, 16
      %v581 = vrot.slane %v579, 4
      %v582 = vshll.u32 %v337, 16
      %v584 = vrot.slane %v582, 5
      %v585 = vor.u32 %v581, %v584
      %v586 = vrot.slane %v585, 4
      %v588 = vshll.u32 %v338, 16
      %v590 = vrot.slane %v588, 5
      %v591 = vsel %vm433, %v586, %v590
      %v592 = vshrl.u32 %v338, 16
      %v594 = vrot.slane %v592, 4
      %v595 = vor.u32 %v594, %v590
      %v596 = vrot.slane %v595, 4
      %v598 = vshll.u32 %v339, 16
      %v600 = vrot.slane %v598, 5
      %v601 = vsel %vm433, %v596, %v600
      %v603 = vshrl.u32 %v340, 16
      %v605 = vrot.slane %v603, 4
      %v606 = vshll.u32 %v340, 16
      %v608 = vrot.slane %v606, 5
      %v609 = vor.u32 %v605, %v608
      %v610 = vrot.slane %v609, 4
      %v612 = vshll.u32 %v341, 16
      %v614 = vrot.slane %v612, 5
      %v615 = vsel %vm433, %v610, %v614
      %v616 = vshrl.u32 %v341, 16
      %v618 = vrot.slane %v616, 4
      %v619 = vor.u32 %v618, %v614
      %v620 = vrot.slane %v619, 4
      %v622 = vshll.u32 %v342, 16
      %v624 = vrot.slane %v622, 5
      %v625 = vsel %vm433, %v620, %v624
      %v626 = vunpack.c.l.b16 %v447
      %v627 = vunpack.c.l.b16 %v457
      %v628 = vunpack.c.l.b16 %v471
      %v629 = vunpack.c.l.b16 %v481
      %v630 = vunpack.c.l.b16 %v495
      %v631 = vunpack.c.l.b16 %v505
      %v632 = vunpack.c.l.b16 %v519
      %v633 = vunpack.c.l.b16 %v529
      %v634 = vunpack.c.l.b16 %v543
      %v635 = vunpack.c.l.b16 %v553
      %v636 = vunpack.c.l.b16 %v567
      %v637 = vunpack.c.l.b16 %v577
      %v638 = vunpack.c.l.b16 %v591
      %v639 = vunpack.c.l.b16 %v601
      %v640 = vunpack.c.l.b16 %v615
      %v641 = vunpack.c.l.b16 %v625
      %v642 = vpack.c.b16 %v627, %v626
      %v643 = vpack.c.b16 %v629, %v628
      %v644 = vpack.c.b16 %v631, %v630
      %v645 = vpack.c.b16 %v633, %v632
      %v646 = vpack.c.b16 %v635, %v634
      %v647 = vpack.c.b16 %v637, %v636
      %v648 = vpack.c.b16 %v639, %v638
      %v649 = vpack.c.b16 %v641, %v640
      %v659 = vunpack.c.l.b16 %v358
      %v660 = vunpack.c.l.b16 %v359
      %v661 = vunpack.c.l.b16 %v360
      %v662 = vunpack.c.l.b16 %v361
      %v663 = vunpack.c.l.b16 %v362
      %v664 = vunpack.c.l.b16 %v363
      %v665 = vunpack.c.l.b16 %v364
      %v666 = vunpack.c.l.b16 %v365
      %v667 = vunpack.c.l.b16 %v366
      %v668 = vpack.c.b16 %v660, %v659
      %v669 = vpack.c.b16 %v662, %v661
      %v670 = vpack.c.b16 %v664, %v663
      %v671 = vpack.c.b16 %v666, %v665
      %v672 = vpack.c.b16 %v667, %v667
      %vm677 = vcmask 588800
      %v679 = vsel %vm677, %v642, 0
      %v682 = vsel %vm677, %v643, 0
      %v685 = vsel %vm677, %v644, 0
      %v688 = vsel %vm677, %v645, 0
      %v691 = vsel %vm677, %v646, 0
      %v694 = vsel %vm677, %v647, 0
      %v697 = vsel %vm677, %v648, 0
      %v700 = vsel %vm677, %v649, 0
      %vm702 = vcmask 1043456
      %v704 = vsel %vm702, %v672, 0
      %706 = vmatpush.bf16.msra.mxu0 0
      %707 = vmatpush.bf16.msra.mxu0 0
      %708 = vmatpush.bf16.msra.mxu0 0
      %709 = vmatpush.bf16.msra.mxu0 %v704
      %710 = vmatpush.bf16.msra.mxu0 %v671
      %711 = vmatpush.bf16.msra.mxu0 %v670
      %712 = vmatpush.bf16.msra.mxu0 %v669
      %713 = vmatpush.bf16.msra.mxu0 %v668
      %714 = vmatmul.bf16.gmra.mxu0 %v679
      %v715 = vpop.f32.mrf.mxu0
      %v716 = vadd.f32 0.0, %v715
      %v717 = vpop.f32.mrf.mxu0
      %v718 = vadd.f32 0.0, %v717
      %719 = vmatmul.bf16.gmra.mxu0 %v682
      %v720 = vpop.f32.mrf.mxu0
      %v721 = vadd.f32 0.0, %v720
      %v722 = vpop.f32.mrf.mxu0
      %v723 = vadd.f32 0.0, %v722
      %724 = vmatmul.bf16.gmra.mxu0 %v685
      %v725 = vpop.f32.mrf.mxu0
      %v726 = vadd.f32 0.0, %v725
      %v727 = vpop.f32.mrf.mxu0
      %v728 = vadd.f32 0.0, %v727
      %729 = vmatmul.bf16.gmra.mxu0 %v688
      %v730 = vpop.f32.mrf.mxu0
      %v731 = vadd.f32 0.0, %v730
      %v732 = vpop.f32.mrf.mxu0
      %v733 = vadd.f32 0.0, %v732
      %734 = vmatmul.bf16.gmra.mxu0 %v691
      %v735 = vpop.f32.mrf.mxu0
      %v736 = vadd.f32 0.0, %v735
      %v737 = vpop.f32.mrf.mxu0
      %v738 = vadd.f32 0.0, %v737
      %739 = vmatmul.bf16.gmra.mxu0 %v694
      %v740 = vpop.f32.mrf.mxu0
      %v741 = vadd.f32 0.0, %v740
      %v742 = vpop.f32.mrf.mxu0
      %v743 = vadd.f32 0.0, %v742
      %744 = vmatmul.bf16.gmra.mxu0 %v697
      %v745 = vpop.f32.mrf.mxu0
      %v746 = vadd.f32 0.0, %v745
      %v747 = vpop.f32.mrf.mxu0
      %v748 = vadd.f32 0.0, %v747
      %749 = vmatmul.bf16.gmra.mxu0 %v700
      %v750 = vpop.f32.mrf.mxu0
      %v751 = vadd.f32 0.0, %v750
      %v752 = vpop.f32.mrf.mxu0
      %v753 = vadd.f32 0.0, %v752
      %754 = vdwg.mxu0
      %v771 = vunpack.c.l.b16 %v319
      %v772 = vunpack.c.l.b16 %v320
      %v773 = vunpack.c.l.b16 %v322
      %v774 = vunpack.c.l.b16 %v323
      %v775 = vunpack.c.l.b16 %v325
      %v776 = vunpack.c.l.b16 %v326
      %v777 = vunpack.c.l.b16 %v328
      %v778 = vunpack.c.l.b16 %v329
      %v779 = vunpack.c.l.b16 %v331
      %v780 = vunpack.c.l.b16 %v332
      %v781 = vunpack.c.l.b16 %v334
      %v782 = vunpack.c.l.b16 %v335
      %v783 = vunpack.c.l.b16 %v337
      %v784 = vunpack.c.l.b16 %v338
      %v785 = vunpack.c.l.b16 %v340
      %v786 = vunpack.c.l.b16 %v341
      %v787 = vpack.c.b16 %v772, %v771
      %v788 = vpack.c.b16 %v774, %v773
      %v789 = vpack.c.b16 %v776, %v775
      %v790 = vpack.c.b16 %v778, %v777
      %v791 = vpack.c.b16 %v780, %v779
      %v792 = vpack.c.b16 %v782, %v781
      %v793 = vpack.c.b16 %v784, %v783
      %v794 = vpack.c.b16 %v786, %v785
      %v804 = vunpack.c.l.b16 %v349
      %v805 = vunpack.c.l.b16 %v350
      %v806 = vunpack.c.l.b16 %v351
      %v807 = vunpack.c.l.b16 %v352
      %v808 = vunpack.c.l.b16 %v353
      %v809 = vunpack.c.l.b16 %v354
      %v810 = vunpack.c.l.b16 %v355
      %v811 = vunpack.c.l.b16 %v356
      %v812 = vunpack.c.l.b16 %v357
      %v813 = vpack.c.b16 %v805, %v804
      %v814 = vpack.c.b16 %v807, %v806
      %v815 = vpack.c.b16 %v809, %v808
      %v816 = vpack.c.b16 %v811, %v810
      %v817 = vpack.c.b16 %v812, %v812
      %v823 = vsel %vm677, %v787, 0
      %v826 = vsel %vm677, %v788, 0
      %v829 = vsel %vm677, %v789, 0
      %v832 = vsel %vm677, %v790, 0
      %v835 = vsel %vm677, %v791, 0
      %v838 = vsel %vm677, %v792, 0
      %v841 = vsel %vm677, %v793, 0
      %v844 = vsel %vm677, %v794, 0
      %v847 = vsel %vm702, %v817, 0
      %849 = vmatpush.bf16.msra.mxu0 0
      %850 = vmatpush.bf16.msra.mxu0 0
      %851 = vmatpush.bf16.msra.mxu0 0
      %852 = vmatpush.bf16.msra.mxu0 %v847
      %853 = vmatpush.bf16.msra.mxu0 %v816
      %854 = vmatpush.bf16.msra.mxu0 %v815
      %855 = vmatpush.bf16.msra.mxu0 %v814
      %856 = vmatpush.bf16.msra.mxu0 %v813
      %857 = vmatmul.bf16.gmra.mxu0 %v823
      %v858 = vpop.f32.mrf.mxu0
      %v859 = vadd.f32 %v716, %v858
      %v860 = vpop.f32.mrf.mxu0
      %v861 = vadd.f32 %v718, %v860
      %862 = vmatmul.bf16.gmra.mxu0 %v826
      %v863 = vpop.f32.mrf.mxu0
      %v864 = vadd.f32 %v721, %v863
      %v865 = vpop.f32.mrf.mxu0
      %v866 = vadd.f32 %v723, %v865
      %867 = vmatmul.bf16.gmra.mxu0 %v829
      %v868 = vpop.f32.mrf.mxu0
      %v869 = vadd.f32 %v726, %v868
      %v870 = vpop.f32.mrf.mxu0
      %v871 = vadd.f32 %v728, %v870
      %872 = vmatmul.bf16.gmra.mxu0 %v832
      %v873 = vpop.f32.mrf.mxu0
      %v874 = vadd.f32 %v731, %v873
      %v875 = vpop.f32.mrf.mxu0
      %v876 = vadd.f32 %v733, %v875
      %877 = vmatmul.bf16.gmra.mxu0 %v835
      %v878 = vpop.f32.mrf.mxu0
      %v879 = vadd.f32 %v736, %v878
      %v880 = vpop.f32.mrf.mxu0
      %v881 = vadd.f32 %v738, %v880
      %882 = vmatmul.bf16.gmra.mxu0 %v838
      %v883 = vpop.f32.mrf.mxu0
      %v884 = vadd.f32 %v741, %v883
      %v885 = vpop.f32.mrf.mxu0
      %v886 = vadd.f32 %v743, %v885
      %887 = vmatmul.bf16.gmra.mxu0 %v841
      %v888 = vpop.f32.mrf.mxu0
      %v889 = vadd.f32 %v746, %v888
      %v890 = vpop.f32.mrf.mxu0
      %v891 = vadd.f32 %v748, %v890
      %892 = vmatmul.bf16.gmra.mxu0 %v844
      %v893 = vpop.f32.mrf.mxu0
      %v894 = vadd.f32 %v751, %v893
      %v895 = vpop.f32.mrf.mxu0
      %v896 = vadd.f32 %v753, %v895
      %897 = vdwg.mxu0
      %vm906 = vcmask 1042432
      %vm907 = vcmask 1046532
      %vm908 = vmor %vm906, %vm907
      %v909 = vrot.slane %v319, 5
      %v910 = vrot.slane %v909, 4
      %v911 = vrot.slane %v320, 5
      %v912 = vsel %vm908, %v910, %v911
      %v913 = vrot.slane %v911, 4
      %v914 = vrot.slane %v321, 5
      %v915 = vsel %vm908, %v913, %v914
      %v916 = vrot.slane %v322, 5
      %v917 = vrot.slane %v916, 4
      %v918 = vrot.slane %v323, 5
      %v919 = vsel %vm908, %v917, %v918
      %v920 = vrot.slane %v918, 4
      %v921 = vrot.slane %v324, 5
      %v922 = vsel %vm908, %v920, %v921
      %v923 = vrot.slane %v325, 5
      %v924 = vrot.slane %v923, 4
      %v925 = vrot.slane %v326, 5
      %v926 = vsel %vm908, %v924, %v925
      %v927 = vrot.slane %v925, 4
      %v928 = vrot.slane %v327, 5
      %v929 = vsel %vm908, %v927, %v928
      %v930 = vrot.slane %v328, 5
      %v931 = vrot.slane %v930, 4
      %v932 = vrot.slane %v329, 5
      %v933 = vsel %vm908, %v931, %v932
      %v934 = vrot.slane %v932, 4
      %v935 = vrot.slane %v330, 5
      %v936 = vsel %vm908, %v934, %v935
      %v937 = vrot.slane %v331, 5
      %v938 = vrot.slane %v937, 4
      %v939 = vrot.slane %v332, 5
      %v940 = vsel %vm908, %v938, %v939
      %v941 = vrot.slane %v939, 4
      %v942 = vrot.slane %v333, 5
      %v943 = vsel %vm908, %v941, %v942
      %v944 = vrot.slane %v334, 5
      %v945 = vrot.slane %v944, 4
      %v946 = vrot.slane %v335, 5
      %v947 = vsel %vm908, %v945, %v946
      %v948 = vrot.slane %v946, 4
      %v949 = vrot.slane %v336, 5
      %v950 = vsel %vm908, %v948, %v949
      %v951 = vrot.slane %v337, 5
      %v952 = vrot.slane %v951, 4
      %v953 = vrot.slane %v338, 5
      %v954 = vsel %vm908, %v952, %v953
      %v955 = vrot.slane %v953, 4
      %v956 = vrot.slane %v339, 5
      %v957 = vsel %vm908, %v955, %v956
      %v958 = vrot.slane %v340, 5
      %v959 = vrot.slane %v958, 4
      %v960 = vrot.slane %v341, 5
      %v961 = vsel %vm908, %v959, %v960
      %v962 = vrot.slane %v960, 4
      %v963 = vrot.slane %v342, 5
      %v964 = vsel %vm908, %v962, %v963
      %v965 = vunpack.c.l.b16 %v912
      %v966 = vunpack.c.l.b16 %v915
      %v967 = vunpack.c.l.b16 %v919
      %v968 = vunpack.c.l.b16 %v922
      %v969 = vunpack.c.l.b16 %v926
      %v970 = vunpack.c.l.b16 %v929
      %v971 = vunpack.c.l.b16 %v933
      %v972 = vunpack.c.l.b16 %v936
      %v973 = vunpack.c.l.b16 %v940
      %v974 = vunpack.c.l.b16 %v943
      %v975 = vunpack.c.l.b16 %v947
      %v976 = vunpack.c.l.b16 %v950
      %v977 = vunpack.c.l.b16 %v954
      %v978 = vunpack.c.l.b16 %v957
      %v979 = vunpack.c.l.b16 %v961
      %v980 = vunpack.c.l.b16 %v964
      %v981 = vpack.c.b16 %v966, %v965
      %v982 = vpack.c.b16 %v968, %v967
      %v983 = vpack.c.b16 %v970, %v969
      %v984 = vpack.c.b16 %v972, %v971
      %v985 = vpack.c.b16 %v974, %v973
      %v986 = vpack.c.b16 %v976, %v975
      %v987 = vpack.c.b16 %v978, %v977
      %v988 = vpack.c.b16 %v980, %v979
      %v998 = vunpack.c.l.b16 %v367
      %v999 = vunpack.c.l.b16 %v368
      %v1000 = vunpack.c.l.b16 %v369
      %v1001 = vunpack.c.l.b16 %v370
      %v1002 = vunpack.c.l.b16 %v371
      %v1003 = vunpack.c.l.b16 %v372
      %v1004 = vunpack.c.l.b16 %v373
      %v1005 = vunpack.c.l.b16 %v374
      %v1006 = vunpack.c.l.b16 %v375
      %v1007 = vpack.c.b16 %v999, %v998
      %v1008 = vpack.c.b16 %v1001, %v1000
      %v1009 = vpack.c.b16 %v1003, %v1002
      %v1010 = vpack.c.b16 %v1005, %v1004
      %v1011 = vpack.c.b16 %v1006, %v1006
      %v1017 = vsel %vm677, %v981, 0
      %v1020 = vsel %vm677, %v982, 0
      %v1023 = vsel %vm677, %v983, 0
      %v1026 = vsel %vm677, %v984, 0
      %v1029 = vsel %vm677, %v985, 0
      %v1032 = vsel %vm677, %v986, 0
      %v1035 = vsel %vm677, %v987, 0
      %v1038 = vsel %vm677, %v988, 0
      %v1041 = vsel %vm702, %v1011, 0
      %1043 = vmatpush.bf16.msra.mxu0 0
      %1044 = vmatpush.bf16.msra.mxu0 0
      %1045 = vmatpush.bf16.msra.mxu0 0
      %1046 = vmatpush.bf16.msra.mxu0 %v1041
      %1047 = vmatpush.bf16.msra.mxu0 %v1010
      %1048 = vmatpush.bf16.msra.mxu0 %v1009
      %1049 = vmatpush.bf16.msra.mxu0 %v1008
      %1050 = vmatpush.bf16.msra.mxu0 %v1007
      %1051 = vmatmul.bf16.gmra.mxu0 %v1017
      %v1052 = vpop.f32.mrf.mxu0
      %v1053 = vadd.f32 0.0, %v1052
      %v1054 = vpop.f32.mrf.mxu0
      %v1055 = vadd.f32 0.0, %v1054
      %1056 = vmatmul.bf16.gmra.mxu0 %v1020
      %v1057 = vpop.f32.mrf.mxu0
      %v1058 = vadd.f32 0.0, %v1057
      %v1059 = vpop.f32.mrf.mxu0
      %v1060 = vadd.f32 0.0, %v1059
      %1061 = vmatmul.bf16.gmra.mxu0 %v1023
      %v1062 = vpop.f32.mrf.mxu0
      %v1063 = vadd.f32 0.0, %v1062
      %v1064 = vpop.f32.mrf.mxu0
      %v1065 = vadd.f32 0.0, %v1064
      %1066 = vmatmul.bf16.gmra.mxu0 %v1026
      %v1067 = vpop.f32.mrf.mxu0
      %v1068 = vadd.f32 0.0, %v1067
      %v1069 = vpop.f32.mrf.mxu0
      %v1070 = vadd.f32 0.0, %v1069
      %1071 = vmatmul.bf16.gmra.mxu0 %v1029
      %v1072 = vpop.f32.mrf.mxu0
      %v1073 = vadd.f32 0.0, %v1072
      %v1074 = vpop.f32.mrf.mxu0
      %v1075 = vadd.f32 0.0, %v1074
      %1076 = vmatmul.bf16.gmra.mxu0 %v1032
      %v1077 = vpop.f32.mrf.mxu0
      %v1078 = vadd.f32 0.0, %v1077
      %v1079 = vpop.f32.mrf.mxu0
      %v1080 = vadd.f32 0.0, %v1079
      %1081 = vmatmul.bf16.gmra.mxu0 %v1035
      %v1082 = vpop.f32.mrf.mxu0
      %v1083 = vadd.f32 0.0, %v1082
      %v1084 = vpop.f32.mrf.mxu0
      %v1085 = vadd.f32 0.0, %v1084
      %1086 = vmatmul.bf16.gmra.mxu0 %v1038
      %v1087 = vpop.f32.mrf.mxu0
      %v1088 = vadd.f32 0.0, %v1087
      %v1089 = vpop.f32.mrf.mxu0
      %v1090 = vadd.f32 0.0, %v1089
      %1091 = vdwg.mxu0
      %v1092 = vadd.f32 %v859, %v1053
      %v1093 = vadd.f32 %v861, %v1055
      %v1094 = vadd.f32 %v864, %v1058
      %v1095 = vadd.f32 %v866, %v1060
      %v1096 = vadd.f32 %v869, %v1063
      %v1097 = vadd.f32 %v871, %v1065
      %v1098 = vadd.f32 %v874, %v1068
      %v1099 = vadd.f32 %v876, %v1070
      %v1100 = vadd.f32 %v879, %v1073
      %v1101 = vadd.f32 %v881, %v1075
      %v1102 = vadd.f32 %v884, %v1078
      %v1103 = vadd.f32 %v886, %v1080
      %v1104 = vadd.f32 %v889, %v1083
      %v1105 = vadd.f32 %v891, %v1085
      %v1106 = vadd.f32 %v894, %v1088
      %v1107 = vadd.f32 %v896, %v1090
      %v1110 = vunpack.c.l.b16 %v343
      %v1111 = vunpack.c.l.b16 %v344
      %v1112 = vpack.c.b16 %v1111, %v1110
      %v1122 = vunpack.c.l.b16 %v376
      %v1123 = vunpack.c.l.b16 %v377
      %v1124 = vunpack.c.l.b16 %v378
      %v1125 = vunpack.c.l.b16 %v379
      %v1126 = vunpack.c.l.b16 %v380
      %v1127 = vunpack.c.l.b16 %v381
      %v1128 = vunpack.c.l.b16 %v382
      %v1129 = vunpack.c.l.b16 %v383
      %v1130 = vunpack.c.l.b16 %v384
      %v1131 = vpack.c.b16 %v1123, %v1122
      %v1132 = vpack.c.b16 %v1125, %v1124
      %v1133 = vpack.c.b16 %v1127, %v1126
      %v1134 = vpack.c.b16 %v1129, %v1128
      %v1135 = vpack.c.b16 %v1130, %v1130
      %v1141 = vsel %vm677, %v1112, 0
      %v1144 = vsel %vm702, %v1135, 0
      %1146 = vmatpush.bf16.msra.mxu0 0
      %1147 = vmatpush.bf16.msra.mxu0 0
      %1148 = vmatpush.bf16.msra.mxu0 0
      %1149 = vmatpush.bf16.msra.mxu0 %v1144
      %1150 = vmatpush.bf16.msra.mxu0 %v1134
      %1151 = vmatpush.bf16.msra.mxu0 %v1133
      %1152 = vmatpush.bf16.msra.mxu0 %v1132
      %1153 = vmatpush.bf16.msra.mxu0 %v1131
      %1154 = vmatmul.bf16.gmra.mxu0 %v826
      %v1155 = vpop.f32.mrf.mxu0
      %v1156 = vadd.f32 0.0, %v1155
      %v1157 = vpop.f32.mrf.mxu0
      %v1158 = vadd.f32 0.0, %v1157
      %1159 = vmatmul.bf16.gmra.mxu0 %v829
      %v1160 = vpop.f32.mrf.mxu0
      %v1161 = vadd.f32 0.0, %v1160
      %v1162 = vpop.f32.mrf.mxu0
      %v1163 = vadd.f32 0.0, %v1162
      %1164 = vmatmul.bf16.gmra.mxu0 %v832
      %v1165 = vpop.f32.mrf.mxu0
      %v1166 = vadd.f32 0.0, %v1165
      %v1167 = vpop.f32.mrf.mxu0
      %v1168 = vadd.f32 0.0, %v1167
      %1169 = vmatmul.bf16.gmra.mxu0 %v835
      %v1170 = vpop.f32.mrf.mxu0
      %v1171 = vadd.f32 0.0, %v1170
      %v1172 = vpop.f32.mrf.mxu0
      %v1173 = vadd.f32 0.0, %v1172
      %1174 = vmatmul.bf16.gmra.mxu0 %v838
      %v1175 = vpop.f32.mrf.mxu0
      %v1176 = vadd.f32 0.0, %v1175
      %v1177 = vpop.f32.mrf.mxu0
      %v1178 = vadd.f32 0.0, %v1177
      %1179 = vmatmul.bf16.gmra.mxu0 %v841
      %v1180 = vpop.f32.mrf.mxu0
      %v1181 = vadd.f32 0.0, %v1180
      %v1182 = vpop.f32.mrf.mxu0
      %v1183 = vadd.f32 0.0, %v1182
      %1184 = vmatmul.bf16.gmra.mxu0 %v844
      %v1185 = vpop.f32.mrf.mxu0
      %v1186 = vadd.f32 0.0, %v1185
      %v1187 = vpop.f32.mrf.mxu0
      %v1188 = vadd.f32 0.0, %v1187
      %1189 = vmatmul.bf16.gmra.mxu0 %v1141
      %v1190 = vpop.f32.mrf.mxu0
      %v1191 = vadd.f32 0.0, %v1190
      %v1192 = vpop.f32.mrf.mxu0
      %v1193 = vadd.f32 0.0, %v1192
      %1194 = vdwg.mxu0
      %v1195 = vadd.f32 %v1092, %v1156
      %v1196 = vadd.f32 %v1093, %v1158
      %v1197 = vadd.f32 %v1094, %v1161
      %v1198 = vadd.f32 %v1095, %v1163
      %v1199 = vadd.f32 %v1096, %v1166
      %v1200 = vadd.f32 %v1097, %v1168
      %v1201 = vadd.f32 %v1098, %v1171
      %v1202 = vadd.f32 %v1099, %v1173
      %v1203 = vadd.f32 %v1100, %v1176
      %v1204 = vadd.f32 %v1101, %v1178
      %v1205 = vadd.f32 %v1102, %v1181
      %v1206 = vadd.f32 %v1103, %v1183
      %v1207 = vadd.f32 %v1104, %v1186
      %v1208 = vadd.f32 %v1105, %v1188
      %v1209 = vadd.f32 %v1106, %v1191
      %v1210 = vadd.f32 %v1107, %v1193
      %v1212 = vshrl.u32 %v343, 16
      %v1214 = vrot.slane %v1212, 4
      %v1215 = vshll.u32 %v343, 16
      %v1217 = vrot.slane %v1215, 5
      %v1218 = vor.u32 %v1214, %v1217
      %v1219 = vrot.slane %v1218, 4
      %v1221 = vshll.u32 %v344, 16
      %v1223 = vrot.slane %v1221, 5
      %v1224 = vsel %vm433, %v1219, %v1223
      %v1225 = vshrl.u32 %v344, 16
      %v1227 = vrot.slane %v1225, 4
      %v1228 = vor.u32 %v1227, %v1223
      %v1229 = vrot.slane %v1228, 4
      %v1231 = vshll.u32 %v345, 16
      %v1233 = vrot.slane %v1231, 5
      %v1234 = vsel %vm433, %v1229, %v1233
      %v1235 = vunpack.c.l.b16 %v1224
      %v1236 = vunpack.c.l.b16 %v1234
      %v1237 = vpack.c.b16 %v1236, %v1235
      %v1247 = vunpack.c.l.b16 %v385
      %v1248 = vunpack.c.l.b16 %v386
      %v1249 = vunpack.c.l.b16 %v387
      %v1250 = vunpack.c.l.b16 %v388
      %v1251 = vunpack.c.l.b16 %v389
      %v1252 = vunpack.c.l.b16 %v390
      %v1253 = vunpack.c.l.b16 %v391
      %v1254 = vunpack.c.l.b16 %v392
      %v1255 = vunpack.c.l.b16 %v393
      %v1256 = vpack.c.b16 %v1248, %v1247
      %v1257 = vpack.c.b16 %v1250, %v1249
      %v1258 = vpack.c.b16 %v1252, %v1251
      %v1259 = vpack.c.b16 %v1254, %v1253
      %v1260 = vpack.c.b16 %v1255, %v1255
      %v1266 = vsel %vm677, %v1237, 0
      %v1269 = vsel %vm702, %v1260, 0
      %1271 = vmatpush.bf16.msra.mxu0 0
      %1272 = vmatpush.bf16.msra.mxu0 0
      %1273 = vmatpush.bf16.msra.mxu0 0
      %1274 = vmatpush.bf16.msra.mxu0 %v1269
      %1275 = vmatpush.bf16.msra.mxu0 %v1259
      %1276 = vmatpush.bf16.msra.mxu0 %v1258
      %1277 = vmatpush.bf16.msra.mxu0 %v1257
      %1278 = vmatpush.bf16.msra.mxu0 %v1256
      %1279 = vmatmul.bf16.gmra.mxu0 %v682
      %v1280 = vpop.f32.mrf.mxu0
      %v1281 = vadd.f32 0.0, %v1280
      %v1282 = vpop.f32.mrf.mxu0
      %v1283 = vadd.f32 0.0, %v1282
      %1284 = vmatmul.bf16.gmra.mxu0 %v685
      %v1285 = vpop.f32.mrf.mxu0
      %v1286 = vadd.f32 0.0, %v1285
      %v1287 = vpop.f32.mrf.mxu0
      %v1288 = vadd.f32 0.0, %v1287
      %1289 = vmatmul.bf16.gmra.mxu0 %v688
      %v1290 = vpop.f32.mrf.mxu0
      %v1291 = vadd.f32 0.0, %v1290
      %v1292 = vpop.f32.mrf.mxu0
      %v1293 = vadd.f32 0.0, %v1292
      %1294 = vmatmul.bf16.gmra.mxu0 %v691
      %v1295 = vpop.f32.mrf.mxu0
      %v1296 = vadd.f32 0.0, %v1295
      %v1297 = vpop.f32.mrf.mxu0
      %v1298 = vadd.f32 0.0, %v1297
      %1299 = vmatmul.bf16.gmra.mxu0 %v694
      %v1300 = vpop.f32.mrf.mxu0
      %v1301 = vadd.f32 0.0, %v1300
      %v1302 = vpop.f32.mrf.mxu0
      %v1303 = vadd.f32 0.0, %v1302
      %1304 = vmatmul.bf16.gmra.mxu0 %v697
      %v1305 = vpop.f32.mrf.mxu0
      %v1306 = vadd.f32 0.0, %v1305
      %v1307 = vpop.f32.mrf.mxu0
      %v1308 = vadd.f32 0.0, %v1307
      %1309 = vmatmul.bf16.gmra.mxu0 %v700
      %v1310 = vpop.f32.mrf.mxu0
      %v1311 = vadd.f32 0.0, %v1310
      %v1312 = vpop.f32.mrf.mxu0
      %v1313 = vadd.f32 0.0, %v1312
      %1314 = vmatmul.bf16.gmra.mxu0 %v1266
      %v1315 = vpop.f32.mrf.mxu0
      %v1316 = vadd.f32 0.0, %v1315
      %v1317 = vpop.f32.mrf.mxu0
      %v1318 = vadd.f32 0.0, %v1317
      %1319 = vdwg.mxu0
      %v1320 = vadd.f32 %v1195, %v1281
      %v1321 = vadd.f32 %v1196, %v1283
      %v1322 = vadd.f32 %v1197, %v1286
      %v1323 = vadd.f32 %v1198, %v1288
      %v1324 = vadd.f32 %v1199, %v1291
      %v1325 = vadd.f32 %v1200, %v1293
      %v1326 = vadd.f32 %v1201, %v1296
      %v1327 = vadd.f32 %v1202, %v1298
      %v1328 = vadd.f32 %v1203, %v1301
      %v1329 = vadd.f32 %v1204, %v1303
      %v1330 = vadd.f32 %v1205, %v1306
      %v1331 = vadd.f32 %v1206, %v1308
      %v1332 = vadd.f32 %v1207, %v1311
      %v1333 = vadd.f32 %v1208, %v1313
      %v1334 = vadd.f32 %v1209, %v1316
      %v1335 = vadd.f32 %v1210, %v1318
      %v1337 = vrot.slane %v343, 5
      %v1338 = vrot.slane %v1337, 4
      %v1339 = vrot.slane %v344, 5
      %v1340 = vsel %vm908, %v1338, %v1339
      %v1341 = vrot.slane %v1339, 4
      %v1342 = vrot.slane %v345, 5
      %v1343 = vsel %vm908, %v1341, %v1342
      %v1344 = vunpack.c.l.b16 %v1340
      %v1345 = vunpack.c.l.b16 %v1343
      %v1346 = vpack.c.b16 %v1345, %v1344
      %v1356 = vunpack.c.l.b16 %v394
      %v1357 = vunpack.c.l.b16 %v395
      %v1358 = vunpack.c.l.b16 %v396
      %v1359 = vunpack.c.l.b16 %v397
      %v1360 = vunpack.c.l.b16 %v398
      %v1361 = vunpack.c.l.b16 %v399
      %v1362 = vunpack.c.l.b16 %v400
      %v1363 = vunpack.c.l.b16 %v401
      %v1364 = vunpack.c.l.b16 %v402
      %v1365 = vpack.c.b16 %v1357, %v1356
      %v1366 = vpack.c.b16 %v1359, %v1358
      %v1367 = vpack.c.b16 %v1361, %v1360
      %v1368 = vpack.c.b16 %v1363, %v1362
      %v1369 = vpack.c.b16 %v1364, %v1364
      %v1375 = vsel %vm677, %v1346, 0
      %v1378 = vsel %vm702, %v1369, 0
      %1380 = vmatpush.bf16.msra.mxu0 0
      %1381 = vmatpush.bf16.msra.mxu0 0
      %1382 = vmatpush.bf16.msra.mxu0 0
      %1383 = vmatpush.bf16.msra.mxu0 %v1378
      %1384 = vmatpush.bf16.msra.mxu0 %v1368
      %1385 = vmatpush.bf16.msra.mxu0 %v1367
      %1386 = vmatpush.bf16.msra.mxu0 %v1366
      %1387 = vmatpush.bf16.msra.mxu0 %v1365
      %1388 = vmatmul.bf16.gmra.mxu0 %v1020
      %v1389 = vpop.f32.mrf.mxu0
      %v1390 = vadd.f32 0.0, %v1389
      %v1391 = vpop.f32.mrf.mxu0
      %v1392 = vadd.f32 0.0, %v1391
      %1393 = vmatmul.bf16.gmra.mxu0 %v1023
      %v1394 = vpop.f32.mrf.mxu0
      %v1395 = vadd.f32 0.0, %v1394
      %v1396 = vpop.f32.mrf.mxu0
      %v1397 = vadd.f32 0.0, %v1396
      %1398 = vmatmul.bf16.gmra.mxu0 %v1026
      %v1399 = vpop.f32.mrf.mxu0
      %v1400 = vadd.f32 0.0, %v1399
      %v1401 = vpop.f32.mrf.mxu0
      %v1402 = vadd.f32 0.0, %v1401
      %1403 = vmatmul.bf16.gmra.mxu0 %v1029
      %v1404 = vpop.f32.mrf.mxu0
      %v1405 = vadd.f32 0.0, %v1404
      %v1406 = vpop.f32.mrf.mxu0
      %v1407 = vadd.f32 0.0, %v1406
      %1408 = vmatmul.bf16.gmra.mxu0 %v1032
      %v1409 = vpop.f32.mrf.mxu0
      %v1410 = vadd.f32 0.0, %v1409
      %v1411 = vpop.f32.mrf.mxu0
      %v1412 = vadd.f32 0.0, %v1411
      %1413 = vmatmul.bf16.gmra.mxu0 %v1035
      %v1414 = vpop.f32.mrf.mxu0
      %v1415 = vadd.f32 0.0, %v1414
      %v1416 = vpop.f32.mrf.mxu0
      %v1417 = vadd.f32 0.0, %v1416
      %1418 = vmatmul.bf16.gmra.mxu0 %v1038
      %v1419 = vpop.f32.mrf.mxu0
      %v1420 = vadd.f32 0.0, %v1419
      %v1421 = vpop.f32.mrf.mxu0
      %v1422 = vadd.f32 0.0, %v1421
      %1423 = vmatmul.bf16.gmra.mxu0 %v1375
      %v1424 = vpop.f32.mrf.mxu0
      %v1425 = vadd.f32 0.0, %v1424
      %v1426 = vpop.f32.mrf.mxu0
      %v1427 = vadd.f32 0.0, %v1426
      %1428 = vdwg.mxu0
      %v1429 = vadd.f32 %v1320, %v1390
      %v1430 = vadd.f32 %v1321, %v1392
      %v1431 = vadd.f32 %v1322, %v1395
      %v1432 = vadd.f32 %v1323, %v1397
      %v1433 = vadd.f32 %v1324, %v1400
      %v1434 = vadd.f32 %v1325, %v1402
      %v1435 = vadd.f32 %v1326, %v1405
      %v1436 = vadd.f32 %v1327, %v1407
      %v1437 = vadd.f32 %v1328, %v1410
      %v1438 = vadd.f32 %v1329, %v1412
      %v1439 = vadd.f32 %v1330, %v1415
      %v1440 = vadd.f32 %v1331, %v1417
      %v1441 = vadd.f32 %v1332, %v1420
      %v1442 = vadd.f32 %v1333, %v1422
      %v1443 = vadd.f32 %v1334, %v1425
      %v1444 = vadd.f32 %v1335, %v1427
      %v1447 = vunpack.c.l.b16 %v346
      %v1448 = vunpack.c.l.b16 %v347
      %v1449 = vpack.c.b16 %v1448, %v1447
      %v1459 = vunpack.c.l.b16 %v403
      %v1460 = vunpack.c.l.b16 %v404
      %v1461 = vunpack.c.l.b16 %v405
      %v1462 = vunpack.c.l.b16 %v406
      %v1463 = vunpack.c.l.b16 %v407
      %v1464 = vunpack.c.l.b16 %v408
      %v1465 = vunpack.c.l.b16 %v409
      %v1466 = vunpack.c.l.b16 %v410
      %v1467 = vunpack.c.l.b16 %v411
      %v1468 = vpack.c.b16 %v1460, %v1459
      %v1469 = vpack.c.b16 %v1462, %v1461
      %v1470 = vpack.c.b16 %v1464, %v1463
      %v1471 = vpack.c.b16 %v1466, %v1465
      %v1472 = vpack.c.b16 %v1467, %v1467
      %v1478 = vsel %vm677, %v1449, 0
      %v1481 = vsel %vm702, %v1472, 0
      %1483 = vmatpush.bf16.msra.mxu0 0
      %1484 = vmatpush.bf16.msra.mxu0 0
      %1485 = vmatpush.bf16.msra.mxu0 0
      %1486 = vmatpush.bf16.msra.mxu0 %v1481
      %1487 = vmatpush.bf16.msra.mxu0 %v1471
      %1488 = vmatpush.bf16.msra.mxu0 %v1470
      %1489 = vmatpush.bf16.msra.mxu0 %v1469
      %1490 = vmatpush.bf16.msra.mxu0 %v1468
      %1491 = vmatmul.bf16.gmra.mxu0 %v829
      %v1492 = vpop.f32.mrf.mxu0
      %v1493 = vadd.f32 0.0, %v1492
      %v1494 = vpop.f32.mrf.mxu0
      %v1495 = vadd.f32 0.0, %v1494
      %1496 = vmatmul.bf16.gmra.mxu0 %v832
      %v1497 = vpop.f32.mrf.mxu0
      %v1498 = vadd.f32 0.0, %v1497
      %v1499 = vpop.f32.mrf.mxu0
      %v1500 = vadd.f32 0.0, %v1499
      %1501 = vmatmul.bf16.gmra.mxu0 %v835
      %v1502 = vpop.f32.mrf.mxu0
      %v1503 = vadd.f32 0.0, %v1502
      %v1504 = vpop.f32.mrf.mxu0
      %v1505 = vadd.f32 0.0, %v1504
      %1506 = vmatmul.bf16.gmra.mxu0 %v838
      %v1507 = vpop.f32.mrf.mxu0
      %v1508 = vadd.f32 0.0, %v1507
      %v1509 = vpop.f32.mrf.mxu0
      %v1510 = vadd.f32 0.0, %v1509
      %1511 = vmatmul.bf16.gmra.mxu0 %v841
      %v1512 = vpop.f32.mrf.mxu0
      %v1513 = vadd.f32 0.0, %v1512
      %v1514 = vpop.f32.mrf.mxu0
      %v1515 = vadd.f32 0.0, %v1514
      %1516 = vmatmul.bf16.gmra.mxu0 %v844
      %v1517 = vpop.f32.mrf.mxu0
      %v1518 = vadd.f32 0.0, %v1517
      %v1519 = vpop.f32.mrf.mxu0
      %v1520 = vadd.f32 0.0, %v1519
      %1521 = vmatmul.bf16.gmra.mxu0 %v1141
      %v1522 = vpop.f32.mrf.mxu0
      %v1523 = vadd.f32 0.0, %v1522
      %v1524 = vpop.f32.mrf.mxu0
      %v1525 = vadd.f32 0.0, %v1524
      %1526 = vmatmul.bf16.gmra.mxu0 %v1478
      %v1527 = vpop.f32.mrf.mxu0
      %v1528 = vadd.f32 0.0, %v1527
      %v1529 = vpop.f32.mrf.mxu0
      %v1530 = vadd.f32 0.0, %v1529
      %1531 = vdwg.mxu0
      %v1532 = vadd.f32 %v1429, %v1493
      %v1533 = vadd.f32 %v1430, %v1495
      %v1534 = vadd.f32 %v1431, %v1498
      %v1535 = vadd.f32 %v1432, %v1500
      %v1536 = vadd.f32 %v1433, %v1503
      %v1537 = vadd.f32 %v1434, %v1505
      %v1538 = vadd.f32 %v1435, %v1508
      %v1539 = vadd.f32 %v1436, %v1510
      %v1540 = vadd.f32 %v1437, %v1513
      %v1541 = vadd.f32 %v1438, %v1515
      %v1542 = vadd.f32 %v1439, %v1518
      %v1543 = vadd.f32 %v1440, %v1520
      %v1544 = vadd.f32 %v1441, %v1523
      %v1545 = vadd.f32 %v1442, %v1525
      %v1546 = vadd.f32 %v1443, %v1528
      %v1547 = vadd.f32 %v1444, %v1530
      %v1549 = vshrl.u32 %v346, 16
      %v1551 = vrot.slane %v1549, 4
      %v1552 = vshll.u32 %v346, 16
      %v1554 = vrot.slane %v1552, 5
      %v1555 = vor.u32 %v1551, %v1554
      %v1556 = vrot.slane %v1555, 4
      %v1558 = vshll.u32 %v347, 16
      %v1560 = vrot.slane %v1558, 5
      %v1561 = vsel %vm433, %v1556, %v1560
      %v1562 = vshrl.u32 %v347, 16
      %v1564 = vrot.slane %v1562, 4
      %v1565 = vor.u32 %v1564, %v1560
      %v1566 = vrot.slane %v1565, 4
      %v1568 = vshll.u32 %v348, 16
      %v1570 = vrot.slane %v1568, 5
      %v1571 = vsel %vm433, %v1566, %v1570
      %v1572 = vunpack.c.l.b16 %v1561
      %v1573 = vunpack.c.l.b16 %v1571
      %v1574 = vpack.c.b16 %v1573, %v1572
      %v1584 = vunpack.c.l.b16 %v412
      %v1585 = vunpack.c.l.b16 %v413
      %v1586 = vunpack.c.l.b16 %v414
      %v1587 = vunpack.c.l.b16 %v415
      %v1588 = vunpack.c.l.b16 %v416
      %v1589 = vunpack.c.l.b16 %v417
      %v1590 = vunpack.c.l.b16 %v418
      %v1591 = vunpack.c.l.b16 %v419
      %v1592 = vunpack.c.l.b16 %v420
      %v1593 = vpack.c.b16 %v1585, %v1584
      %v1594 = vpack.c.b16 %v1587, %v1586
      %v1595 = vpack.c.b16 %v1589, %v1588
      %v1596 = vpack.c.b16 %v1591, %v1590
      %v1597 = vpack.c.b16 %v1592, %v1592
      %v1603 = vsel %vm677, %v1574, 0
      %v1606 = vsel %vm702, %v1597, 0
      %1608 = vmatpush.bf16.msra.mxu0 0
      %1609 = vmatpush.bf16.msra.mxu0 0
      %1610 = vmatpush.bf16.msra.mxu0 0
      %1611 = vmatpush.bf16.msra.mxu0 %v1606
      %1612 = vmatpush.bf16.msra.mxu0 %v1596
      %1613 = vmatpush.bf16.msra.mxu0 %v1595
      %1614 = vmatpush.bf16.msra.mxu0 %v1594
      %1615 = vmatpush.bf16.msra.mxu0 %v1593
      %1616 = vmatmul.bf16.gmra.mxu0 %v685
      %v1617 = vpop.f32.mrf.mxu0
      %v1618 = vadd.f32 0.0, %v1617
      %v1619 = vpop.f32.mrf.mxu0
      %v1620 = vadd.f32 0.0, %v1619
      %1621 = vmatmul.bf16.gmra.mxu0 %v688
      %v1622 = vpop.f32.mrf.mxu0
      %v1623 = vadd.f32 0.0, %v1622
      %v1624 = vpop.f32.mrf.mxu0
      %v1625 = vadd.f32 0.0, %v1624
      %1626 = vmatmul.bf16.gmra.mxu0 %v691
      %v1627 = vpop.f32.mrf.mxu0
      %v1628 = vadd.f32 0.0, %v1627
      %v1629 = vpop.f32.mrf.mxu0
      %v1630 = vadd.f32 0.0, %v1629
      %1631 = vmatmul.bf16.gmra.mxu0 %v694
      %v1632 = vpop.f32.mrf.mxu0
      %v1633 = vadd.f32 0.0, %v1632
      %v1634 = vpop.f32.mrf.mxu0
      %v1635 = vadd.f32 0.0, %v1634
      %1636 = vmatmul.bf16.gmra.mxu0 %v697
      %v1637 = vpop.f32.mrf.mxu0
      %v1638 = vadd.f32 0.0, %v1637
      %v1639 = vpop.f32.mrf.mxu0
      %v1640 = vadd.f32 0.0, %v1639
      %1641 = vmatmul.bf16.gmra.mxu0 %v700
      %v1642 = vpop.f32.mrf.mxu0
      %v1643 = vadd.f32 0.0, %v1642
      %v1644 = vpop.f32.mrf.mxu0
      %v1645 = vadd.f32 0.0, %v1644
      %1646 = vmatmul.bf16.gmra.mxu0 %v1266
      %v1647 = vpop.f32.mrf.mxu0
      %v1648 = vadd.f32 0.0, %v1647
      %v1649 = vpop.f32.mrf.mxu0
      %v1650 = vadd.f32 0.0, %v1649
      %1651 = vmatmul.bf16.gmra.mxu0 %v1603
      %v1652 = vpop.f32.mrf.mxu0
      %v1653 = vadd.f32 0.0, %v1652
      %v1654 = vpop.f32.mrf.mxu0
      %v1655 = vadd.f32 0.0, %v1654
      %1656 = vdwg.mxu0
      %v1657 = vadd.f32 %v1532, %v1618
      %v1658 = vadd.f32 %v1533, %v1620
      %v1659 = vadd.f32 %v1534, %v1623
      %v1660 = vadd.f32 %v1535, %v1625
      %v1661 = vadd.f32 %v1536, %v1628
      %v1662 = vadd.f32 %v1537, %v1630
      %v1663 = vadd.f32 %v1538, %v1633
      %v1664 = vadd.f32 %v1539, %v1635
      %v1665 = vadd.f32 %v1540, %v1638
      %v1666 = vadd.f32 %v1541, %v1640
      %v1667 = vadd.f32 %v1542, %v1643
      %v1668 = vadd.f32 %v1543, %v1645
      %v1669 = vadd.f32 %v1544, %v1648
      %v1670 = vadd.f32 %v1545, %v1650
      %v1671 = vadd.f32 %v1546, %v1653
      %v1672 = vadd.f32 %v1547, %v1655
      %v1674 = vrot.slane %v346, 5
      %v1675 = vrot.slane %v1674, 4
      %v1676 = vrot.slane %v347, 5
      %v1677 = vsel %vm908, %v1675, %v1676
      %v1678 = vrot.slane %v1676, 4
      %v1679 = vrot.slane %v348, 5
      %v1680 = vsel %vm908, %v1678, %v1679
      %v1681 = vunpack.c.l.b16 %v1677
      %v1682 = vunpack.c.l.b16 %v1680
      %v1683 = vpack.c.b16 %v1682, %v1681
      %v1693 = vunpack.c.l.b16 %v421
      %v1694 = vunpack.c.l.b16 %v422
      %v1695 = vunpack.c.l.b16 %v423
      %v1696 = vunpack.c.l.b16 %v424
      %v1697 = vunpack.c.l.b16 %v425
      %v1698 = vunpack.c.l.b16 %v426
      %v1699 = vunpack.c.l.b16 %v427
      %v1700 = vunpack.c.l.b16 %v428
      %v1701 = vunpack.c.l.b16 %v429
      %v1702 = vpack.c.b16 %v1694, %v1693
      %v1703 = vpack.c.b16 %v1696, %v1695
      %v1704 = vpack.c.b16 %v1698, %v1697
      %v1705 = vpack.c.b16 %v1700, %v1699
      %v1706 = vpack.c.b16 %v1701, %v1701
      %v1712 = vsel %vm677, %v1683, 0
      %v1715 = vsel %vm702, %v1706, 0
      %1717 = vmatpush.bf16.msra.mxu0 0
      %1718 = vmatpush.bf16.msra.mxu0 0
      %1719 = vmatpush.bf16.msra.mxu0 0
      %1720 = vmatpush.bf16.msra.mxu0 %v1715
      %1721 = vmatpush.bf16.msra.mxu0 %v1705
      %1722 = vmatpush.bf16.msra.mxu0 %v1704
      %1723 = vmatpush.bf16.msra.mxu0 %v1703
      %1724 = vmatpush.bf16.msra.mxu0 %v1702
      %1725 = vmatmul.bf16.gmra.mxu0 %v1023
      %v1726 = vpop.f32.mrf.mxu0
      %v1727 = vadd.f32 0.0, %v1726
      %v1728 = vpop.f32.mrf.mxu0
      %v1729 = vadd.f32 0.0, %v1728
      %1730 = vmatmul.bf16.gmra.mxu0 %v1026
      %v1731 = vpop.f32.mrf.mxu0
      %v1732 = vadd.f32 0.0, %v1731
      %v1733 = vpop.f32.mrf.mxu0
      %v1734 = vadd.f32 0.0, %v1733
      %1735 = vmatmul.bf16.gmra.mxu0 %v1029
      %v1736 = vpop.f32.mrf.mxu0
      %v1737 = vadd.f32 0.0, %v1736
      %v1738 = vpop.f32.mrf.mxu0
      %v1739 = vadd.f32 0.0, %v1738
      %1740 = vmatmul.bf16.gmra.mxu0 %v1032
      %v1741 = vpop.f32.mrf.mxu0
      %v1742 = vadd.f32 0.0, %v1741
      %v1743 = vpop.f32.mrf.mxu0
      %v1744 = vadd.f32 0.0, %v1743
      %1745 = vmatmul.bf16.gmra.mxu0 %v1035
      %v1746 = vpop.f32.mrf.mxu0
      %v1747 = vadd.f32 0.0, %v1746
      %v1748 = vpop.f32.mrf.mxu0
      %v1749 = vadd.f32 0.0, %v1748
      %1750 = vmatmul.bf16.gmra.mxu0 %v1038
      %v1751 = vpop.f32.mrf.mxu0
      %v1752 = vadd.f32 0.0, %v1751
      %v1753 = vpop.f32.mrf.mxu0
      %v1754 = vadd.f32 0.0, %v1753
      %1755 = vmatmul.bf16.gmra.mxu0 %v1375
      %v1756 = vpop.f32.mrf.mxu0
      %v1757 = vadd.f32 0.0, %v1756
      %v1758 = vpop.f32.mrf.mxu0
      %v1759 = vadd.f32 0.0, %v1758
      %1760 = vmatmul.bf16.gmra.mxu0 %v1712
      %v1761 = vpop.f32.mrf.mxu0
      %v1762 = vadd.f32 0.0, %v1761
      %v1763 = vpop.f32.mrf.mxu0
      %v1764 = vadd.f32 0.0, %v1763
      %1765 = vdwg.mxu0
      %v1766 = vadd.f32 %v1657, %v1727
      %v1767 = vadd.f32 %v1658, %v1729
      %v1768 = vadd.f32 %v1659, %v1732
      %v1769 = vadd.f32 %v1660, %v1734
      %v1770 = vadd.f32 %v1661, %v1737
      %v1771 = vadd.f32 %v1662, %v1739
      %v1772 = vadd.f32 %v1663, %v1742
      %v1773 = vadd.f32 %v1664, %v1744
      %v1774 = vadd.f32 %v1665, %v1747
      %v1775 = vadd.f32 %v1666, %v1749
      %v1776 = vadd.f32 %v1667, %v1752
      %v1777 = vadd.f32 %v1668, %v1754
      %v1778 = vadd.f32 %v1669, %v1757
      %v1779 = vadd.f32 %v1670, %v1759
      %v1780 = vadd.f32 %v1671, %v1762
      %v1781 = vadd.f32 %v1672, %v1764
      %v1783 = vperm.slane %v430, 0
      %v1785 = vadd.f32 %v1766, %v1783
      %v1786 = vadd.f32 %v1767, %v1783
      %v1787 = vadd.f32 %v1768, %v1783
      %v1788 = vadd.f32 %v1769, %v1783
      %v1789 = vadd.f32 %v1770, %v1783
      %v1790 = vadd.f32 %v1771, %v1783
      %v1791 = vadd.f32 %v1772, %v1783
      %v1792 = vadd.f32 %v1773, %v1783
      %v1793 = vadd.f32 %v1774, %v1783
      %v1794 = vadd.f32 %v1775, %v1783
      %v1795 = vadd.f32 %v1776, %v1783
      %v1796 = vadd.f32 %v1777, %v1783
      %v1797 = vadd.f32 %v1778, %v1783
      %v1798 = vadd.f32 %v1779, %v1783
      %v1799 = vadd.f32 %v1780, %v1783
      %v1800 = vadd.f32 %v1781, %v1783
      %v1801 = vmul.f32 %v1785, 0.01
      %v1802 = vmul.f32 %v1786, 0.01
      %v1803 = vmul.f32 %v1787, 0.01
      %v1804 = vmul.f32 %v1788, 0.01
      %v1805 = vmul.f32 %v1789, 0.01
      %v1806 = vmul.f32 %v1790, 0.01
      %v1807 = vmul.f32 %v1791, 0.01
      %v1808 = vmul.f32 %v1792, 0.01
      %v1809 = vmul.f32 %v1793, 0.01
      %v1810 = vmul.f32 %v1794, 0.01
      %v1811 = vmul.f32 %v1795, 0.01
      %v1812 = vmul.f32 %v1796, 0.01
      %v1813 = vmul.f32 %v1797, 0.01
      %v1814 = vmul.f32 %v1798, 0.01
      %v1815 = vmul.f32 %v1799, 0.01
      %v1816 = vmul.f32 %v1800, 0.01
      %v1817 = vmax.f32 %v1785, %v1801
      %v1818 = vmax.f32 %v1786, %v1802
      %v1819 = vmax.f32 %v1787, %v1803
      %v1820 = vmax.f32 %v1788, %v1804
      %v1821 = vmax.f32 %v1789, %v1805
      %v1822 = vmax.f32 %v1790, %v1806
      %v1823 = vmax.f32 %v1791, %v1807
      %v1824 = vmax.f32 %v1792, %v1808
      %v1825 = vmax.f32 %v1793, %v1809
      %v1826 = vmax.f32 %v1794, %v1810
      %v1827 = vmax.f32 %v1795, %v1811
      %v1828 = vmax.f32 %v1796, %v1812
      %v1829 = vmax.f32 %v1797, %v1813
      %v1830 = vmax.f32 %v1798, %v1814
      %v1831 = vmax.f32 %v1799, %v1815
      %v1832 = vmax.f32 %v1800, %v1816
      %1849 = vrot.lane.b32.xlu0 %v1817, 64
      %v1850 = vpop.permute.xlu0 %1849
      %1851 = vrot.lane.b32.xlu0 %v1818, 64
      %v1852 = vpop.permute.xlu0 %1851
      %1853 = vrot.lane.b32.xlu0 %v1819, 64
      %v1854 = vpop.permute.xlu0 %1853
      %1855 = vrot.lane.b32.xlu0 %v1820, 64
      %v1856 = vpop.permute.xlu0 %1855
      %1857 = vrot.lane.b32.xlu0 %v1821, 64
      %v1858 = vpop.permute.xlu0 %1857
      %1859 = vrot.lane.b32.xlu0 %v1822, 64
      %v1860 = vpop.permute.xlu0 %1859
      %1861 = vrot.lane.b32.xlu0 %v1823, 64
      %v1862 = vpop.permute.xlu0 %1861
      %1863 = vrot.lane.b32.xlu0 %v1824, 64
      %v1864 = vpop.permute.xlu0 %1863
      %1865 = vrot.lane.b32.xlu0 %v1825, 64
      %v1866 = vpop.permute.xlu0 %1865
      %1867 = vrot.lane.b32.xlu0 %v1826, 64
      %v1868 = vpop.permute.xlu0 %1867
      %1869 = vrot.lane.b32.xlu0 %v1827, 64
      %v1870 = vpop.permute.xlu0 %1869
      %1871 = vrot.lane.b32.xlu0 %v1828, 64
      %v1872 = vpop.permute.xlu0 %1871
      %1873 = vrot.lane.b32.xlu0 %v1829, 64
      %v1874 = vpop.permute.xlu0 %1873
      %1875 = vrot.lane.b32.xlu0 %v1830, 64
      %v1876 = vpop.permute.xlu0 %1875
      %1877 = vrot.lane.b32.xlu0 %v1831, 64
      %v1878 = vpop.permute.xlu0 %1877
      %1879 = vrot.lane.b32.xlu0 %v1832, 64
      %v1880 = vpop.permute.xlu0 %1879
      %v1897 = vmax.f32 %v1817, %v1850
      %v1898 = vmax.f32 %v1818, %v1852
      %v1899 = vmax.f32 %v1819, %v1854
      %v1900 = vmax.f32 %v1820, %v1856
      %v1901 = vmax.f32 %v1821, %v1858
      %v1902 = vmax.f32 %v1822, %v1860
      %v1903 = vmax.f32 %v1823, %v1862
      %v1904 = vmax.f32 %v1824, %v1864
      %v1905 = vmax.f32 %v1825, %v1866
      %v1906 = vmax.f32 %v1826, %v1868
      %v1907 = vmax.f32 %v1827, %v1870
      %v1908 = vmax.f32 %v1828, %v1872
      %v1909 = vmax.f32 %v1829, %v1874
      %v1910 = vmax.f32 %v1830, %v1876
      %v1911 = vmax.f32 %v1831, %v1878
      %v1912 = vmax.f32 %v1832, %v1880
      %v1913 = vmax.f32 %v1897, %v1899
      %v1914 = vmax.f32 %v1898, %v1900
      %v1915 = vmax.f32 %v1901, %v1903
      %v1916 = vmax.f32 %v1902, %v1904
      %v1917 = vmax.f32 %v1905, %v1907
      %v1918 = vmax.f32 %v1906, %v1908
      %v1919 = vmax.f32 %v1909, %v1911
      %v1920 = vmax.f32 %v1910, %v1912
      %vm1921 = vcmask 523264
      %1922 = vst.msk [vmem:[#allocation2] sm:$0xff] %vm1921, %v1913
      %1923 = vst.msk [vmem:[#allocation2 + $0x8] sm:$0xff] %vm1921, %v1914
      %1924 = vst.msk [vmem:[#allocation2 + $0x10] sm:$0xff] %vm1921, %v1915
      %1925 = vst.msk [vmem:[#allocation2 + $0x18] sm:$0xff] %vm1921, %v1916
      %1926 = vst.msk [vmem:[#allocation2 + $0x20] sm:$0xff] %vm1921, %v1917
      %1927 = vst.msk [vmem:[#allocation2 + $0x28] sm:$0xff] %vm1921, %v1918
      %1928 = vst.msk [vmem:[#allocation2 + $0x30] sm:$0xff] %vm1921, %v1919
      %1929 = vst.msk [vmem:[#allocation2 + $0x38] sm:$0xff] %vm1921, %v1920
      %v1930 = vld [vmem:[#allocation2] ss:$2 sm:$0xff]
      %s1931 = scalar_lea.vmem [#allocation2], 16
      %v1932 = vld [vmem:[%s1931] ss:$2 sm:$0xff]
      %s1933 = scalar_lea.vmem [#allocation2], 32
      %v1934 = vld [vmem:[%s1933] ss:$2 sm:$0xff]
      %s1935 = scalar_lea.vmem [#allocation2], 48
      %v1936 = vld [vmem:[%s1935] ss:$2 sm:$0xff]
      %s1937 = scalar_lea.vmem [#allocation2], 1
      %v1938 = vld [vmem:[%s1937] ss:$2 sm:$0xff]
      %s1939 = scalar_lea.vmem [#allocation2], 17
      %v1940 = vld [vmem:[%s1939] ss:$2 sm:$0xff]
      %s1941 = scalar_lea.vmem [#allocation2], 33
      %v1942 = vld [vmem:[%s1941] ss:$2 sm:$0xff]
      %s1943 = scalar_lea.vmem [#allocation2], 49
      %v1944 = vld [vmem:[%s1943] ss:$2 sm:$0xff]
      %v1945 = vmax.f32 %v1930, %v1938
      %v1946 = vmax.f32 %v1932, %v1940
      %v1947 = vmax.f32 %v1934, %v1942
      %v1948 = vmax.f32 %v1936, %v1944
      %1949 = vst.msk [vmem:[%s316] sm:$0xff] %vm1921, %v1945
      %1950 = vst.msk [vmem:[%s316 + $0x8] sm:$0xff] %vm1921, %v1946
      %1951 = vst.msk [vmem:[%s316 + $0x10] sm:$0xff] %vm1921, %v1947
      %1952 = vst.msk [vmem:[%s316 + $0x18] sm:$0xff] %vm1921, %v1948
      %s1953 = smul.u32 4, %s20
      %p1954 = scmp.lt.s32.totalorder %s19, 1
      %s1955 = scalar_select %p1954, %s19, 1
      %p1956 = scmp.lt.s32.totalorder %s1953, 7
      %s1957 = scalar_select %p1956, %s1953, 7
      %s1958 = smul.addr %s1955, 8
      %s1959 = sadd.s32 %s1957, %s1958
      %s1960 = smul.addr %s1959, 8
      %s1961 = scalar_lea.vmem %s4, %s1960
      // Predicated region
      $region37: #{cosmoflow_conv_block.1} parent=35 // pred_check
        %p1962 = pneg %p149
      $region38: #{cosmoflow_conv_block.1} parent=35 // pred_check_branch
        %1964 = sbr.rel (%p1962) target = $region40
      $region39: #{cosmoflow_conv_block.1} parent=35 // pred_region
        %s1965 = smul.u32 4, %s20
      $region40: #{cosmoflow_conv_block.1} parent=35 // pred_fallthru
        _
    $region36: #{cosmoflow_conv_block.1} parent=5 // pred_fallthru
      _
    %p1966 = scmp.le.s32.totalorder 2, %s10
    // Predicated region
    $region41: #{cosmoflow_conv_block.1} parent=5 // pred_check
      %p1967 = pneg %p1966
    $region42: #{cosmoflow_conv_block.1} parent=5 // pred_check_branch
      %1969 = sbr.rel (%p1967) target = $region44
    $region43: #{cosmoflow_conv_block.1} parent=5 // pred_region
      %s1970 = ssub.s32 %s10, 2
      // Predicated region
      $region45: #{cosmoflow_conv_block.1} parent=43 // pred_check
        %p1971 = pneg %p155
      $region46: #{cosmoflow_conv_block.1} parent=43 // pred_check_branch
        %1973 = sbr.rel (%p1971) target = $region48
      $region47: #{cosmoflow_conv_block.1} parent=43 // pred_region
        %s1974 = smul.u32 4, %s22
        %p1975 = scmp.lt.s32.totalorder %s21, 1
        %s1976 = scalar_select %p1975, %s21, 1
        %p1977 = scmp.lt.s32.totalorder %s1974, 7
        %s1978 = scalar_select %p1977, %s1974, 7
        %s1979 = smul.addr %s1976, 8
        %s1980 = sadd.s32 %s1978, %s1979
        %s1981 = smul.addr %s1980, 8
        %s1982 = scalar_lea.vmem %s4, %s1981
      $region48: #{cosmoflow_conv_block.1} parent=43 // pred_fallthru
        _
    $region44: #{cosmoflow_conv_block.1} parent=5 // pred_fallthru
      _
  $region6: #{cosmoflow_conv_block.1} parent=0 // loop_footer
    %s14 = sadd.s32 1, %s10
  $region7: #{cosmoflow_conv_block.1} parent=0 // loop_footer_branch
    %9 = sbr.rel target = $region3
  $region8: #{cosmoflow_conv_block.1} parent=0 // loop_exit
    _

</llo_original>
